<compile_context>
chip_gen: v7x
topology: tpu7x:2x2x1
jax: 0.10.0
libtpu: 0.0.40
codegen_flags: <defaults>
</compile_context>

<pallas_src>
import functools

import jax
import jax.numpy as jnp
import numpy as np
from jax.experimental import pallas as pl
from jax.experimental.pallas import tpu as pltpu

ANCHORS = (((10, 13), (16, 30), (22, 23)),
           ((30, 61), (62, 45), (59, 119)),
           ((116, 90), (156, 198), (373, 326)))
NUM_CLASSES = 10
NUM_ANCHORS = 3


def _round_up(x, m):
    return (x + m - 1) // m * m


# ----------------------------- Pallas kernels ------------------------------- #
def _mm_bias_act_kernel(x_ref, w_ref, shift_ref, o_ref, acc_ref, *, slope, apply_act):
    """bf16 matmul accumulated in f32 over the K grid axis.  The accumulator is
    initialised with the (broadcast) bias/BN-shift, so the epilogue is just the
    leaky-ReLU select + cast (cheap on v5e's single vst slot)."""
    @pl.when(pl.program_id(2) == 0)
    def _():
        acc_ref[...] = jnp.broadcast_to(shift_ref[...], acc_ref.shape)

    acc_ref[...] += jnp.dot(x_ref[...], w_ref[...],
                            preferred_element_type=jnp.float32)

    @pl.when(pl.program_id(2) == pl.num_programs(2) - 1)
    def _():
        y = acc_ref[...]
        if apply_act:                      # static (trace-time) flag
            y = jnp.where(y >= 0.0, y, slope * y)
        o_ref[...] = y.astype(o_ref.dtype)


def _mm_bias_act_addend_kernel(x_ref, w_ref, shift_ref, add_ref, o_ref, acc_ref,
                               *, slope, apply_act):
    """Same as above but the accumulator is initialised with a precomputed
    partial result (addend) + bias.  Used to fuse upsample+concat+1x1conv."""
    @pl.when(pl.program_id(2) == 0)
    def _():
        acc_ref[...] = add_ref[...].astype(jnp.float32) + shift_ref[...]

    acc_ref[...] += jnp.dot(x_ref[...], w_ref[...],
                            preferred_element_type=jnp.float32)

    @pl.when(pl.program_id(2) == pl.num_programs(2) - 1)
    def _():
        y = acc_ref[...]
        if apply_act:
            y = jnp.where(y >= 0.0, y, slope * y)
        o_ref[...] = y.astype(o_ref.dtype)


# ------------------------------ matmul wrapper ------------------------------- #
_TK_CANDIDATES = (2304, 2048, 1536, 1152, 1024, 768, 512, 384, 256, 128)


def _pick_tiles(M, Kp, Np):
    """Large tiles (few grid steps, hidden weight DMA) while keeping the
    double-buffered VMEM plan ~<= 12 MiB (fits v7x's 64 MiB / 32 MiB scoped)."""
    if M >= 512:
        TM = 512
    elif M >= 256:
        TM = 256
    else:
        TM = _round_up(max(M, 1), 16)      # 16: bf16 sublane packing
    Mp = _round_up(M, TM)

    TN = 512 if Np % 512 == 0 else (256 if Np % 256 == 0 else 128)
    # v7x has 2 TensorCores: keep at least 2 blocks over the "parallel" axes so
    # both cores get work (neutral on 1-TC v5e/v6e — M is tiny in this regime).
    if Mp // TM == 1 and Np // TN == 1 and Np >= 256:
        TN //= 2

    # Prefer large TK (fewer f32-accumulator RMW passes; covers weight DMA).
    TK = next(t for t in _TK_CANDIDATES if Kp % t == 0)
    return TM, Mp, TN, TK


def matmul_bias_act(x2d, p, addend2d=None):
    """(M, K) @ weights (+ optional addend) + shift, then leaky-relu.

    Returns the *channel-padded* (M, Np) result (lane-dense last dim); only the
    M-padding (if any) is trimmed.  Weights/shift were pre-padded at init with
    zeros, so padded output channels are exactly zero.
    """
    w_pad, shift_pad = p["w"], p["shift"]
    M, K = x2d.shape
    Kp, Np = w_pad.shape
    TM, Mp, TN, TK = _pick_tiles(M, Kp, Np)

    xp = x2d.astype(jnp.bfloat16)
    if (Mp, Kp) != (M, K):
        xp = jnp.pad(xp, ((0, Mp - M), (0, Kp - K)))

    out_dtype = p["out_dtype"]
    cost = pl.CostEstimate(
        flops=int(2 * Mp * Np * Kp),
        transcendentals=0,
        bytes_accessed=int(Mp * Kp * 2 + Kp * Np * 2
                           + Mp * Np * jnp.dtype(out_dtype).itemsize
                           + (0 if addend2d is None else Mp * Np * 4)))

    in_specs = [
        pl.BlockSpec((TM, TK), lambda i, j, k: (i, k)),
        # TODO(synk): pipeline_mode=pl.Buffered(3) on this weight spec would hide
        # residual weight-DMA exposure on the tiny-M head layers; the large TK
        # (full K in 1-2 steps) already covers most of it.
        pl.BlockSpec((TK, TN), lambda i, j, k: (k, j)),
        pl.BlockSpec((1, TN), lambda i, j, k: (0, j)),
    ]
    operands = [xp, w_pad, shift_pad]

    if addend2d is None:
        kernel = functools.partial(_mm_bias_act_kernel,
                                   slope=p["slope"], apply_act=p["apply_act"])
    else:
        ap = addend2d
        if Mp != M:
            ap = jnp.pad(ap, ((0, Mp - M), (0, 0)))
        in_specs.append(pl.BlockSpec((TM, TN), lambda i, j, k: (i, j)))
        operands.append(ap)
        kernel = functools.partial(_mm_bias_act_addend_kernel,
                                   slope=p["slope"], apply_act=p["apply_act"])

    out = pl.pallas_call(
        kernel,
        out_shape=jax.ShapeDtypeStruct((Mp, Np), out_dtype),
        grid_spec=pltpu.PrefetchScalarGridSpec(
            num_scalar_prefetch=0,
            grid=(Mp // TM, Np // TN, Kp // TK),
            in_specs=in_specs,
            out_specs=pl.BlockSpec((TM, TN), lambda i, j, k: (i, j)),
            scratch_shapes=[pltpu.VMEM((TM, TN), jnp.float32)],
        ),
        compiler_params=pltpu.CompilerParams(
            dimension_semantics=("parallel", "parallel", "arbitrary"),
            vmem_limit_bytes=32 * 1024 * 1024),
        cost_estimate=cost,
    )(*operands)

    if Mp != M:
        out = out[:M]
    return out


# ------------------------------ conv wrappers -------------------------------- #
def _im2col(x, k, stride, pad):
    """x: NHWC (bf16) -> (N*Ho*Wo, k*k*C) patch matrix, ordering (kh, kw, Cin)."""
    # TODO(synk): for 3x3 layers the 9x im2col HBM amplification could be removed
    # by turning the 9 taps into extra K-grid iterations whose LHS index_map
    # (pl.Element offsets) walks the padded NHWC tensor directly; kept as
    # plain-JAX glue here because Element-indexed BlockSpecs are not exercised in
    # this codebase yet.
    N, H, W, C = x.shape
    if pad:
        x = jnp.pad(x, ((0, 0), (pad, pad), (pad, pad), (0, 0)))
    Ho = (H + 2 * pad - k) // stride + 1
    Wo = (W + 2 * pad - k) // stride + 1
    patches = []
    for i in range(k):
        for j in range(k):
            patches.append(x[:, i:i + Ho * stride:stride, j:j + Wo * stride:stride, :])
    cols = jnp.concatenate(patches, axis=-1)
    return cols.reshape(N * Ho * Wo, k * k * C), Ho, Wo


def conv2d(x, p):
    """ConvLayer / raw Conv2d forward. x: NHWC (channel-padded) bf16."""
    cols, Ho, Wo = _im2col(x, p["k"], p["stride"], p["pad"])
    out = matmul_bias_act(cols, p)
    return out.reshape(x.shape[0], Ho, Wo, p["w"].shape[1])


def conv2d_concat_fused(x_bottom, p_bot, addend_nhwc):
    """1x1 conv over concat([top, bottom], channel) where the `top` contribution
    was precomputed (at the pre-upsample resolution, then nearest-upsampled) and
    is added inside the kernel.  Avoids materialising the concat tensor."""
    N, H, W, C = x_bottom.shape
    cols = x_bottom.reshape(N * H * W, C)
    add2d = addend_nhwc.reshape(N * H * W, addend_nhwc.shape[-1])
    out = matmul_bias_act(cols, p_bot, addend2d=add2d)
    return out.reshape(N, H, W, p_bot["w"].shape[1])


def upsample2(x):
    # nn.Upsample(scale_factor=2, mode='nearest') on NHWC
    return jnp.repeat(jnp.repeat(x, 2, axis=1), 2, axis=2)


def unpack(x, a):
    # torch: (b, a*attrs, h, w) -> view(b,a,attrs,h,w).permute(0,1,3,4,2)
    # here (NHWC): (b,h,w,a*attrs) -> (b,a,h,w,attrs)
    b, h, w, c = x.shape
    return jnp.transpose(x.reshape(b, h, w, a, c // a), (0, 3, 1, 2, 4))


# ------------------------------ parameters ---------------------------------- #
def init_conv(key, cin, cout, k=3, stride=1, pad=0, negative_slope=0.0,
              batch_norm=True, bias=False, activation=True, cin_store=None):
    """cin_store: number of channels of the (possibly padded) tensor this layer
    will actually receive; real weights go in rows [:cin], the rest are zero."""
    cin_store = cin if cin_store is None else cin_store
    k1, k2, k3, k4 = jax.random.split(key, 4)
    w = jax.random.normal(k1, (k, k, cin, cout), jnp.float32) / np.sqrt(k * k * cin)
    if batch_norm:
        gamma = 1.0 + 0.1 * jax.random.normal(k2, (cout,), jnp.float32)
        beta = 0.1 * jax.random.normal(k3, (cout,), jnp.float32)
        mean = jnp.zeros((cout,), jnp.float32)
        var = jnp.ones((cout,), jnp.float32)
        scale = gamma / jnp.sqrt(var + 1e-5)
        shift = beta - mean * scale
    else:
        scale = jnp.ones((cout,), jnp.float32)
        shift = (0.1 * jax.random.normal(k4, (cout,), jnp.float32)
                 if bias else jnp.zeros((cout,), jnp.float32))
    # Fold BN scale into the weights: conv(x, w*scale) + shift == conv(x, w)*scale + shift
    w_full = jnp.zeros((k, k, cin_store, cout), jnp.float32).at[:, :, :cin, :].set(w * scale)
    K = k * k * cin_store
    Kp, Np = _round_up(K, 128), _round_up(cout, 128)
    w2d = w_full.reshape(K, cout)
    w_pad = jnp.zeros((Kp, Np), jnp.bfloat16).at[:K, :cout].set(w2d.astype(jnp.bfloat16))
    shift_pad = jnp.zeros((1, Np), jnp.float32).at[0, :cout].set(shift)
    return {"w": w_pad, "shift": shift_pad, "cout": cout, "k": k, "stride": stride,
            "pad": pad, "slope": float(negative_slope),
            "apply_act": bool(activation),
            "out_dtype": jnp.bfloat16 if activation else jnp.float32}


def split_concat_conv(p, k_top):
    """Split a 1x1 conv over concat([upsampled, skip]) into:
       top  — bias-free, activation-free partial over the upsampled channels
              (computed at the pre-upsample resolution, f32),
       bot  — the skip-channel conv that adds the partial back in-kernel.
    Exact because 1x1 conv and nearest upsample commute."""
    p_top = dict(p)
    p_top["w"] = p["w"][:k_top]
    p_top["shift"] = jnp.zeros_like(p["shift"])
    p_top["apply_act"] = False
    p_top["out_dtype"] = jnp.float32          # keep the partial sum in f32
    p_bot = dict(p)
    p_bot["w"] = p["w"][k_top:]
    return p_top, p_bot


def init_conv_block(key, filters):
    ks = jax.random.split(key, 4)
    half = filters // 2
    return [
        init_conv(ks[0], half, filters, k=3, pad=1, negative_slope=0.1),
        init_conv(ks[1], filters, half, k=1, negative_slope=0.1),
        init_conv(ks[2], half, filters, k=3, pad=1, negative_slope=0.1),
        init_conv(ks[3], filters, half, k=1, negative_slope=0.1),
    ]


def init_yolo(key):
    ks = iter(jax.random.split(key, 32))
    n_out = NUM_ANCHORS * (NUM_CLASSES + 5)
    p = {}
    # backbone stand-in (Darknet53 shape contract); bb1/bb2 consume the
    # channel-padded (128ch) activations of bb0/bb1.
    p["bb0"] = init_conv(next(ks), 3, 32, k=3, stride=2, pad=1, negative_slope=0.1)
    p["bb1"] = init_conv(next(ks), 32, 64, k=3, stride=2, pad=1, negative_slope=0.1,
                         cin_store=128)
    p["bb2"] = init_conv(next(ks), 64, 256, k=3, stride=2, pad=1, negative_slope=0.1,
                         cin_store=128)                                          # skip[36]
    p["bb3"] = init_conv(next(ks), 256, 512, k=3, stride=2, pad=1, negative_slope=0.1)  # skip[61]
    p["bb4"] = init_conv(next(ks), 512, 1024, k=3, stride=2, pad=1, negative_slope=0.1)
    # head, scale 1
    p["conv_1_1"] = init_conv(next(ks), 1024, 512, k=1, negative_slope=0.1)
    p["conv_1_2"] = init_conv_block(next(ks), 1024)
    p["conv_1_3"] = init_conv(next(ks), 512, 1024, k=3, pad=1, negative_slope=0.1)
    p["conv_1_4"] = init_conv(next(ks), 1024, n_out, k=1, batch_norm=False, bias=True,
                              activation=False)
    # head, scale 2 (conv_2_2 consumes concat([up(256ch), skip 512ch]); split for fusion)
    p["conv_2_1"] = init_conv(next(ks), 512, 256, k=1, negative_slope=0.1)
    p["conv_2_2"] = split_concat_conv(
        init_conv(next(ks), 768, 256, k=1, negative_slope=0.1), 256)
    p["conv_2_3"] = init_conv_block(next(ks), 512)
    p["conv_2_4"] = init_conv(next(ks), 256, 512, k=3, pad=1, negative_slope=0.1)
    p["conv_2_5"] = init_conv(next(ks), 512, n_out, k=1, batch_norm=False, bias=True,
                              activation=False)
    # head, scale 3 (conv_3_2 consumes concat([up(128ch), skip 256ch]); split for fusion)
    p["conv_3_1"] = init_conv(next(ks), 256, 128, k=1, negative_slope=0.1)
    p["conv_3_2"] = split_concat_conv(
        init_conv(next(ks), 384, 128, k=1, negative_slope=0.1), 128)
    p["conv_3_3"] = init_conv_block(next(ks), 256)
    p["conv_3_4"] = init_conv(next(ks), 128, 256, k=3, pad=1, negative_slope=0.1)
    p["conv_3_5"] = init_conv(next(ks), 256, n_out, k=1, batch_norm=False, bias=True,
                              activation=False)
    # NOTE: self.classifier (Linear 1024->num_classes) is unused in forward.
    # TODO(synk): optional fp8 weight packing for the Cin>=512 head layers on v7x
    # (its MXU takes fp8, not int8); not portable to v5e/v6e so left out.
    return p


# ------------------------------- forward ------------------------------------ #
def yolo_forward(params, x_nchw):
    N, C, H, W = x_nchw.shape
    assert x_nchw.ndim == 4
    assert H % 32 == 0 and W % 32 == 0
    x = jnp.transpose(x_nchw, (0, 2, 3, 1)).astype(jnp.bfloat16)  # -> NHWC bf16
    n_out = NUM_ANCHORS * (NUM_CLASSES + 5)

    # backbone (channel-padded activations carried end-to-end)
    x = conv2d(x, params["bb0"])
    x = conv2d(x, params["bb1"])
    skip_36 = conv2d(x, params["bb2"])          # 256ch @ H/8
    skip_61 = conv2d(skip_36, params["bb3"])    # 512ch @ H/16
    x = conv2d(skip_61, params["bb4"])          # 1024ch @ H/32

    # scale 1
    x = conv2d(x, params["conv_1_1"])
    for layer in params["conv_1_2"]:
        x = conv2d(x, layer)
    out1 = conv2d(x, params["conv_1_3"])
    out1 = conv2d(out1, params["conv_1_4"])[..., :n_out]
    out1 = unpack(out1, NUM_ANCHORS)

    # scale 2 — upsample + concat fused into conv_2_2
    y = conv2d(x, params["conv_2_1"])                        # 256ch @ H/32
    p22_top, p22_bot = params["conv_2_2"]
    a = conv2d(y, p22_top)                                   # partial @ H/32 (f32)
    a = upsample2(a)                                         # partial @ H/16
    y = conv2d_concat_fused(skip_61, p22_bot, a)             # 256ch @ H/16
    for layer in params["conv_2_3"]:
        y = conv2d(y, layer)
    out2 = conv2d(y, params["conv_2_4"])
    out2 = conv2d(out2, params["conv_2_5"])[..., :n_out]
    out2 = unpack(out2, NUM_ANCHORS)

    # scale 3 — upsample + concat fused into conv_3_2
    z = conv2d(y, params["conv_3_1"])                        # 128ch @ H/16
    p32_top, p32_bot = params["conv_3_2"]
    b = conv2d(z, p32_top)                                   # partial @ H/16 (f32)
    b = upsample2(b)                                         # partial @ H/8
    z = conv2d_concat_fused(skip_36, p32_bot, b)             # 128ch @ H/8
    for layer in params["conv_3_3"]:
        z = conv2d(z, layer)
    out3 = conv2d(z, params["conv_3_4"])
    out3 = conv2d(out3, params["conv_3_5"])[..., :n_out]
    out3 = unpack(out3, NUM_ANCHORS)

    anchors = jnp.asarray(ANCHORS, dtype=jnp.float32)
    strides = jnp.asarray([H / out3.shape[2], H / out2.shape[2], H / out1.shape[2]],
                          dtype=jnp.float32)
    return {"inference": [out3, out2, out1], "anchors": anchors, "strides": strides}


if __name__ == "__main__":
    key = jax.random.PRNGKey(0)
    pkey, xkey = jax.random.split(key)
    params = init_yolo(pkey)
    x = jax.random.normal(xkey, (2, 3, 32, 32), dtype=jnp.float32)  # N,C,H,W

    out = yolo_forward(params, x)
    jax.block_until_ready(out["inference"])
    jax.block_until_ready(out["anchors"])
    jax.block_until_ready(out["strides"])

    o3, o2, o1 = out["inference"]
    assert o3.shape == (2, 3, 4, 4, NUM_CLASSES + 5)
    assert o2.shape == (2, 3, 2, 2, NUM_CLASSES + 5)
    assert o1.shape == (2, 3, 1, 1, NUM_CLASSES + 5)
    assert o3.dtype == jnp.float32 and o2.dtype == jnp.float32 and o1.dtype == jnp.float32
    assert out["anchors"].shape == (3, 3, 2)
    assert out["strides"].shape == (3,)
    print("KERNEL_OK")
</pallas_src>

<mosaic_0001>
module attributes {stable_mosaic.version = 11 : i64} {
  func.func @_mm_bias_act_kernel(%arg0: i32, %arg1: i32, %arg2: i32, %arg3: memref<512x128xbf16, #tpu.memory_space<vmem>>, %arg4: memref<128x128xbf16, #tpu.memory_space<vmem>>, %arg5: memref<1x128xf32, #tpu.memory_space<vmem>>, %arg6: memref<512x128xbf16, #tpu.memory_space<vmem>>, %arg7: memref<512x128xf32, #tpu.memory_space<vmem>>) attributes {dimension_semantics = [#tpu.dimension_semantics<parallel>, #tpu.dimension_semantics<parallel>, #tpu.dimension_semantics<arbitrary>], iteration_bounds = array<i64: 1, 1, 1>, scalar_prefetch = 0 : i64, scratch_operands = 1 : i64, tpu.core_type = #tpu.core_type<tc>, window_params = [{transform_indices = @transform_0, window_bounds = array<i64: 512, 128>}, {transform_indices = @transform_1, window_bounds = array<i64: 128, 128>}, {transform_indices = @transform_2, window_bounds = array<i64: 1, 128>}, {transform_indices = @transform_3, window_bounds = array<i64: 512, 128>}]} {
    %c0_i32 = arith.constant 0 : i32
    %0 = arith.cmpi eq, %arg2, %c0_i32 : i32
    %1 = arith.extui %0 : i1 to i32
    %c0_i32_0 = arith.constant 0 : i32
    %2 = arith.cmpi ne, %1, %c0_i32_0 : i32
    scf.if %2 {
      %c0_10 = arith.constant 0 : index
      %c0_11 = arith.constant 0 : index
      %12 = vector.load %arg5[%c0_10, %c0_11] : memref<1x128xf32, #tpu.memory_space<vmem>>, vector<1x128xf32>
      %13 = vector.shape_cast %12 : vector<1x128xf32> to vector<1x128xf32>
      %14 = vector.broadcast %13 : vector<1x128xf32> to vector<512x128xf32>
      %c0_12 = arith.constant 0 : index
      %c0_13 = arith.constant 0 : index
      %15 = vector.load %arg7[%c0_12, %c0_13] : memref<512x128xf32, #tpu.memory_space<vmem>>, vector<512x128xf32>
      tpu.vector_store %arg7[%c0_12, %c0_13], %14 {strides = array<i32>} : memref<512x128xf32, #tpu.memory_space<vmem>>, vector<512x128xf32>,
    } else {
    }
    %c0 = arith.constant 0 : index
    %c0_1 = arith.constant 0 : index
    %3 = vector.load %arg7[%c0, %c0_1] : memref<512x128xf32, #tpu.memory_space<vmem>>, vector<512x128xf32>
    %c0_2 = arith.constant 0 : index
    %c0_3 = arith.constant 0 : index
    %4 = vector.load %arg3[%c0_2, %c0_3] : memref<512x128xbf16, #tpu.memory_space<vmem>>, vector<512x128xbf16>
    %c0_4 = arith.constant 0 : index
    %c0_5 = arith.constant 0 : index
    %5 = vector.load %arg4[%c0_4, %c0_5] : memref<128x128xbf16, #tpu.memory_space<vmem>>, vector<128x128xbf16>
    %cst = arith.constant dense<0.000000e+00> : vector<512x128xf32>
    %6 = tpu.matmul %4, %5, %cst {dimension_numbers = #tpu.dot_dimension_numbers<[1], [0], [0], [1], [0, 0, 1, 1], [], []>} : vector<512x128xbf16>, vector<128x128xbf16>, vector<512x128xf32> -> vector<512x128xf32>
    %7 = arith.addf %3, %6 : vector<512x128xf32>
    %c0_6 = arith.constant 0 : index
    %c0_7 = arith.constant 0 : index
    %8 = vector.load %arg7[%c0_6, %c0_7] : memref<512x128xf32, #tpu.memory_space<vmem>>, vector<512x128xf32>
    tpu.vector_store %arg7[%c0_6, %c0_7], %7 {strides = array<i32>} : memref<512x128xf32, #tpu.memory_space<vmem>>, vector<512x128xf32>,
    %c0_i32_8 = arith.constant 0 : i32
    %9 = arith.cmpi eq, %arg2, %c0_i32_8 : i32
    %10 = arith.extui %9 : i1 to i32
    %c0_i32_9 = arith.constant 0 : i32
    %11 = arith.cmpi ne, %10, %c0_i32_9 : i32
    scf.if %11 {
      %c0_10 = arith.constant 0 : index
      %c0_11 = arith.constant 0 : index
      %12 = vector.load %arg7[%c0_10, %c0_11] : memref<512x128xf32, #tpu.memory_space<vmem>>, vector<512x128xf32>
      %cst_12 = arith.constant 0.000000e+00 : f32
      %13 = vector.broadcast %cst_12 : f32 to vector<512x128xf32>
      %14 = arith.cmpf oge, %12, %13 : vector<512x128xf32>
      %cst_13 = arith.constant 1.000000e-01 : f32
      %15 = vector.broadcast %cst_13 : f32 to vector<512x128xf32>
      %16 = arith.mulf %15, %12 : vector<512x128xf32>
      %17 = arith.select %14, %12, %16 : vector<512x128xi1>, vector<512x128xf32>
      %18 = arith.truncf %17 : vector<512x128xf32> to vector<512x128xbf16>
      %c0_14 = arith.constant 0 : index
      %c0_15 = arith.constant 0 : index
      %19 = vector.load %arg6[%c0_14, %c0_15] : memref<512x128xbf16, #tpu.memory_space<vmem>>, vector<512x128xbf16>
      tpu.vector_store %arg6[%c0_14, %c0_15], %18 {strides = array<i32>} : memref<512x128xbf16, #tpu.memory_space<vmem>>, vector<512x128xbf16>,
    } else {
    }
    return
  }
  func.func @transform_0(%arg0: i32, %arg1: i32, %arg2: i32) -> (i32, i32) {
    %c0_i32 = arith.constant 0 : i32
    return %arg0, %arg2 : i32, i32
  }
  func.func @transform_1(%arg0: i32, %arg1: i32, %arg2: i32) -> (i32, i32) {
    %c0_i32 = arith.constant 0 : i32
    return %arg2, %arg1 : i32, i32
  }
  func.func @transform_2(%arg0: i32, %arg1: i32, %arg2: i32) -> (i32, i32) {
    %c0_i32 = arith.constant 0 : i32
    %c0_i32_0 = arith.constant 0 : i32
    return %c0_i32, %arg1 : i32, i32
  }
  func.func @transform_3(%arg0: i32, %arg1: i32, %arg2: i32) -> (i32, i32) {
    %c0_i32 = arith.constant 0 : i32
    return %arg0, %arg1 : i32, i32
  }
}

</mosaic_0001>

<llo_original>
// kernel: tpu_custom_call.1
$region0: #{tpu_custom_call.1}
  #allocation0 [shape = 'u32[]', space=smem, size = 0x4, offset = 0x4, fixed_abs, tag = 'smem constant byte address 0x4 - core index']
  #allocation1 [shape = 'u32[144,128]{1,0:T(1,128)}', space=vmem, size = 0x12000, scoped, tag = 'internal scratch']
  #allocation2 [shape = 'f32[512,128]{1,0:T(8,128)}', space=vmem, size = 0x40000, scoped, tag = 'scratch operand']
  %s0 = inlined_call_operand.hbm [shape: bf16[512,128], index: 0, kind: input, shape index: {}]
  %s1 = inlined_call_operand.hbm [shape: bf16[128,128], index: 1, kind: input, shape index: {}]
  %s2 = inlined_call_operand.vmem [shape: f32[1,128], index: 2, kind: input, shape index: {}]
  %s3 = inlined_call_operand.hbm [shape: bf16[512,128], index: 3, kind: output, shape index: {}]
  %s4 = sld [smem:[#allocation0]]
  $region38: #{tpu_custom_call.1} parent=0
    _
  %s6 = ssub.s32 1, %s4
  %s7 = scalar_select 0, %s6, %s4
  $region1: #{tpu_custom_call.1} parent=0
    #allocation3 [shape = 'u8[131072]{0}', space=vmem, size = 0x20000, scoped, tag = 'input window, operand 0, single buffered']
    #allocation4 [shape = 's32[1]{0}', space=sflag, size = 0x4, scoped, tag = 'scoped memory for tpu_custom_call.1']
    #allocation5 [shape = 's32[1]{0}', space=sflag, size = 0x4, scoped, tag = 'scoped memory for tpu_custom_call.1']
    #allocation6 [shape = 'u8[32768]{0}', space=vmem, size = 0x8000, scoped, tag = 'input window, operand 1, single buffered']
    #allocation7 [shape = 's32[1]{0}', space=sflag, size = 0x4, scoped, tag = 'scoped memory for tpu_custom_call.1']
    #allocation8 [shape = 'u8[131072]{0}', space=vmem, size = 0x20000, scoped, tag = 'output window, operand 0, single buffered']
    %8 = vsyncpa [#allocation4], 0
    %9 = vsyncpa [#allocation7], 0
    %10 = vsyncpa [#allocation5], 0
    // Predicated region
    $region2: #{tpu_custom_call.1} parent=1 // pred_check
      _
    $region3: #{tpu_custom_call.1} parent=1 // pred_check_branch
      %12 = sbr.rel (0) target = $region5
    $region4: #{tpu_custom_call.1} parent=1 // pred_region
      %s14 = ssub.s32 4096, 4096
      %15 = vsyncadd [#allocation4], %s14
      %s16 = sshll.u32 [#allocation3], 4
      %s17 = int_to_ptr.vmem [resolvable:$true] %s16
      %22 = dma.hbm_to_vmem [thread:$0]  %s0, 4096, %s17, [#allocation4], 64, 64, 4
    $region5: #{tpu_custom_call.1} parent=1 // pred_fallthru
      _
    // Predicated region
    $region6: #{tpu_custom_call.1} parent=1 // pred_check
      _
    $region7: #{tpu_custom_call.1} parent=1 // pred_check_branch
      %24 = sbr.rel (0) target = $region9
    $region8: #{tpu_custom_call.1} parent=1 // pred_region
      %s26 = ssub.s32 1024, 1024
      %27 = vsyncadd [#allocation7], %s26
      %s28 = sshll.u32 [#allocation6], 4
      %s29 = int_to_ptr.vmem [resolvable:$true] %s28
      %34 = dma.hbm_to_vmem [thread:$0]  %s1, 1024, %s29, [#allocation7], 64, 64, 4
    $region9: #{tpu_custom_call.1} parent=1 // pred_fallthru
      _
    // Predicated region
    $region10: #{tpu_custom_call.1} parent=1 // pred_check
      _
    $region11: #{tpu_custom_call.1} parent=1 // pred_check_branch
      %36 = sbr.rel (0) target = $region13
    $region12: #{tpu_custom_call.1} parent=1 // pred_region
      _
    $region13: #{tpu_custom_call.1} parent=1 // pred_fallthru
      _
    // Predicated region
    $region14: #{tpu_custom_call.1} parent=1 // pred_check
      _
    $region15: #{tpu_custom_call.1} parent=1 // pred_check_branch
      %38 = sbr.rel (0) target = $region17
    $region16: #{tpu_custom_call.1} parent=1 // pred_region
      %39 = dma.done [#allocation4], 4096
    $region17: #{tpu_custom_call.1} parent=1 // pred_fallthru
      _
    // Predicated region
    $region18: #{tpu_custom_call.1} parent=1 // pred_check
      _
    $region19: #{tpu_custom_call.1} parent=1 // pred_check_branch
      %41 = sbr.rel (0) target = $region21
    $region20: #{tpu_custom_call.1} parent=1 // pred_region
      %42 = dma.done [#allocation7], 1024
    $region21: #{tpu_custom_call.1} parent=1 // pred_fallthru
      _
    %p44 = scmp.eq.s32.totalorder 0, 0
    // Predicated region
    $region22: #{tpu_custom_call.1} parent=1 // pred_check
      %p45 = pneg %p44
    $region23: #{tpu_custom_call.1} parent=1 // pred_check_branch
      %47 = sbr.rel (%p45) target = $region25
    $region24: #{tpu_custom_call.1} parent=1 // pred_region
      %v48 = vld [vmem:[%s2] sm:$0x1]
      %v50 = vlaneseq
      %v51 = vshrl.u32 %v50, 7
      %v52 = vsub.s32 0, %v51
      %v53 = vrot.slane %v48, %v52
      %55 = vst [vmem:[#allocation2] sm:$0xff] %v53
      %56 = vst [vmem:[#allocation2 + $0x8] sm:$0xff] %v53
      %57 = vst [vmem:[#allocation2 + $0x10] sm:$0xff] %v53
      %58 = vst [vmem:[#allocation2 + $0x18] sm:$0xff] %v53
      %59 = vst [vmem:[#allocation2 + $0x20] sm:$0xff] %v53
      %60 = vst [vmem:[#allocation2 + $0x28] sm:$0xff] %v53
      %61 = vst [vmem:[#allocation2 + $0x30] sm:$0xff] %v53
      %62 = vst [vmem:[#allocation2 + $0x38] sm:$0xff] %v53
      %63 = vst [vmem:[#allocation2 + $0x40] sm:$0xff] %v53
      %64 = vst [vmem:[#allocation2 + $0x48] sm:$0xff] %v53
      %65 = vst [vmem:[#allocation2 + $0x50] sm:$0xff] %v53
      %66 = vst [vmem:[#allocation2 + $0x58] sm:$0xff] %v53
      %67 = vst [vmem:[#allocation2 + $0x60] sm:$0xff] %v53
      %68 = vst [vmem:[#allocation2 + $0x68] sm:$0xff] %v53
      %69 = vst [vmem:[#allocation2 + $0x70] sm:$0xff] %v53
      %70 = vst [vmem:[#allocation2 + $0x78] sm:$0xff] %v53
      %71 = vst [vmem:[#allocation2 + $0x80] sm:$0xff] %v53
      %72 = vst [vmem:[#allocation2 + $0x88] sm:$0xff] %v53
      %73 = vst [vmem:[#allocation2 + $0x90] sm:$0xff] %v53
      %74 = vst [vmem:[#allocation2 + $0x98] sm:$0xff] %v53
      %75 = vst [vmem:[#allocation2 + $0xa0] sm:$0xff] %v53
      %76 = vst [vmem:[#allocation2 + $0xa8] sm:$0xff] %v53
      %77 = vst [vmem:[#allocation2 + $0xb0] sm:$0xff] %v53
      %78 = vst [vmem:[#allocation2 + $0xb8] sm:$0xff] %v53
      %79 = vst [vmem:[#allocation2 + $0xc0] sm:$0xff] %v53
      %80 = vst [vmem:[#allocation2 + $0xc8] sm:$0xff] %v53
      %81 = vst [vmem:[#allocation2 + $0xd0] sm:$0xff] %v53
      %82 = vst [vmem:[#allocation2 + $0xd8] sm:$0xff] %v53
      %83 = vst [vmem:[#allocation2 + $0xe0] sm:$0xff] %v53
      %84 = vst [vmem:[#allocation2 + $0xe8] sm:$0xff] %v53
      %85 = vst [vmem:[#allocation2 + $0xf0] sm:$0xff] %v53
      %86 = vst [vmem:[#allocation2 + $0xf8] sm:$0xff] %v53
      %87 = vst [vmem:[#allocation2 + $0x100] sm:$0xff] %v53
      %88 = vst [vmem:[#allocation2 + $0x108] sm:$0xff] %v53
      %89 = vst [vmem:[#allocation2 + $0x110] sm:$0xff] %v53
      %90 = vst [vmem:[#allocation2 + $0x118] sm:$0xff] %v53
      %91 = vst [vmem:[#allocation2 + $0x120] sm:$0xff] %v53
      %92 = vst [vmem:[#allocation2 + $0x128] sm:$0xff] %v53
      %93 = vst [vmem:[#allocation2 + $0x130] sm:$0xff] %v53
      %94 = vst [vmem:[#allocation2 + $0x138] sm:$0xff] %v53
      %95 = vst [vmem:[#allocation2 + $0x140] sm:$0xff] %v53
      %96 = vst [vmem:[#allocation2 + $0x148] sm:$0xff] %v53
      %97 = vst [vmem:[#allocation2 + $0x150] sm:$0xff] %v53
      %98 = vst [vmem:[#allocation2 + $0x158] sm:$0xff] %v53
      %99 = vst [vmem:[#allocation2 + $0x160] sm:$0xff] %v53
      %100 = vst [vmem:[#allocation2 + $0x168] sm:$0xff] %v53
      %101 = vst [vmem:[#allocation2 + $0x170] sm:$0xff] %v53
      %102 = vst [vmem:[#allocation2 + $0x178] sm:$0xff] %v53
      %103 = vst [vmem:[#allocation2 + $0x180] sm:$0xff] %v53
      %104 = vst [vmem:[#allocation2 + $0x188] sm:$0xff] %v53
      %105 = vst [vmem:[#allocation2 + $0x190] sm:$0xff] %v53
      %106 = vst [vmem:[#allocation2 + $0x198] sm:$0xff] %v53
      %107 = vst [vmem:[#allocation2 + $0x1a0] sm:$0xff] %v53
      %108 = vst [vmem:[#allocation2 + $0x1a8] sm:$0xff] %v53
      %109 = vst [vmem:[#allocation2 + $0x1b0] sm:$0xff] %v53
      %110 = vst [vmem:[#allocation2 + $0x1b8] sm:$0xff] %v53
      %111 = vst [vmem:[#allocation2 + $0x1c0] sm:$0xff] %v53
      %112 = vst [vmem:[#allocation2 + $0x1c8] sm:$0xff] %v53
      %113 = vst [vmem:[#allocation2 + $0x1d0] sm:$0xff] %v53
      %114 = vst [vmem:[#allocation2 + $0x1d8] sm:$0xff] %v53
      %115 = vst [vmem:[#allocation2 + $0x1e0] sm:$0xff] %v53
      %116 = vst [vmem:[#allocation2 + $0x1e8] sm:$0xff] %v53
      %117 = vst [vmem:[#allocation2 + $0x1f0] sm:$0xff] %v53
      %118 = vst [vmem:[#allocation2 + $0x1f8] sm:$0xff] %v53
    $region25: #{tpu_custom_call.1} parent=1 // pred_fallthru
      _
    %v119 = vld [vmem:[#allocation2] sm:$0xff]
    %v120 = vld [vmem:[#allocation2 + $0x8] sm:$0xff]
    %v121 = vld [vmem:[#allocation2 + $0x10] sm:$0xff]
    %v122 = vld [vmem:[#allocation2 + $0x18] sm:$0xff]
    %v123 = vld [vmem:[#allocation2 + $0x20] sm:$0xff]
    %v124 = vld [vmem:[#allocation2 + $0x28] sm:$0xff]
    %v125 = vld [vmem:[#allocation2 + $0x30] sm:$0xff]
    %v126 = vld [vmem:[#allocation2 + $0x38] sm:$0xff]
    %v127 = vld [vmem:[#allocation2 + $0x40] sm:$0xff]
    %v128 = vld [vmem:[#allocation2 + $0x48] sm:$0xff]
    %v129 = vld [vmem:[#allocation2 + $0x50] sm:$0xff]
    %v130 = vld [vmem:[#allocation2 + $0x58] sm:$0xff]
    %v131 = vld [vmem:[#allocation2 + $0x60] sm:$0xff]
    %v132 = vld [vmem:[#allocation2 + $0x68] sm:$0xff]
    %v133 = vld [vmem:[#allocation2 + $0x70] sm:$0xff]
    %v134 = vld [vmem:[#allocation2 + $0x78] sm:$0xff]
    %v135 = vld [vmem:[#allocation2 + $0x80] sm:$0xff]
    %v136 = vld [vmem:[#allocation2 + $0x88] sm:$0xff]
    %v137 = vld [vmem:[#allocation2 + $0x90] sm:$0xff]
    %v138 = vld [vmem:[#allocation2 + $0x98] sm:$0xff]
    %v139 = vld [vmem:[#allocation2 + $0xa0] sm:$0xff]
    %v140 = vld [vmem:[#allocation2 + $0xa8] sm:$0xff]
    %v141 = vld [vmem:[#allocation2 + $0xb0] sm:$0xff]
    %v142 = vld [vmem:[#allocation2 + $0xb8] sm:$0xff]
    %v143 = vld [vmem:[#allocation2 + $0xc0] sm:$0xff]
    %v144 = vld [vmem:[#allocation2 + $0xc8] sm:$0xff]
    %v145 = vld [vmem:[#allocation2 + $0xd0] sm:$0xff]
    %v146 = vld [vmem:[#allocation2 + $0xd8] sm:$0xff]
    %v147 = vld [vmem:[#allocation2 + $0xe0] sm:$0xff]
    %v148 = vld [vmem:[#allocation2 + $0xe8] sm:$0xff]
    %v149 = vld [vmem:[#allocation2 + $0xf0] sm:$0xff]
    %v150 = vld [vmem:[#allocation2 + $0xf8] sm:$0xff]
    %v151 = vld [vmem:[#allocation2 + $0x100] sm:$0xff]
    %v152 = vld [vmem:[#allocation2 + $0x108] sm:$0xff]
    %v153 = vld [vmem:[#allocation2 + $0x110] sm:$0xff]
    %v154 = vld [vmem:[#allocation2 + $0x118] sm:$0xff]
    %v155 = vld [vmem:[#allocation2 + $0x120] sm:$0xff]
    %v156 = vld [vmem:[#allocation2 + $0x128] sm:$0xff]
    %v157 = vld [vmem:[#allocation2 + $0x130] sm:$0xff]
    %v158 = vld [vmem:[#allocation2 + $0x138] sm:$0xff]
    %v159 = vld [vmem:[#allocation2 + $0x140] sm:$0xff]
    %v160 = vld [vmem:[#allocation2 + $0x148] sm:$0xff]
    %v161 = vld [vmem:[#allocation2 + $0x150] sm:$0xff]
    %v162 = vld [vmem:[#allocation2 + $0x158] sm:$0xff]
    %v163 = vld [vmem:[#allocation2 + $0x160] sm:$0xff]
    %v164 = vld [vmem:[#allocation2 + $0x168] sm:$0xff]
    %v165 = vld [vmem:[#allocation2 + $0x170] sm:$0xff]
    %v166 = vld [vmem:[#allocation2 + $0x178] sm:$0xff]
    %v167 = vld [vmem:[#allocation2 + $0x180] sm:$0xff]
    %v168 = vld [vmem:[#allocation2 + $0x188] sm:$0xff]
    %v169 = vld [vmem:[#allocation2 + $0x190] sm:$0xff]
    %v170 = vld [vmem:[#allocation2 + $0x198] sm:$0xff]
    %v171 = vld [vmem:[#allocation2 + $0x1a0] sm:$0xff]
    %v172 = vld [vmem:[#allocation2 + $0x1a8] sm:$0xff]
    %v173 = vld [vmem:[#allocation2 + $0x1b0] sm:$0xff]
    %v174 = vld [vmem:[#allocation2 + $0x1b8] sm:$0xff]
    %v175 = vld [vmem:[#allocation2 + $0x1c0] sm:$0xff]
    %v176 = vld [vmem:[#allocation2 + $0x1c8] sm:$0xff]
    %v177 = vld [vmem:[#allocation2 + $0x1d0] sm:$0xff]
    %v178 = vld [vmem:[#allocation2 + $0x1d8] sm:$0xff]
    %v179 = vld [vmem:[#allocation2 + $0x1e0] sm:$0xff]
    %v180 = vld [vmem:[#allocation2 + $0x1e8] sm:$0xff]
    %v181 = vld [vmem:[#allocation2 + $0x1f0] sm:$0xff]
    %v182 = vld [vmem:[#allocation2 + $0x1f8] sm:$0xff]
    %v183 = vld [vmem:[#allocation3] sm:$0xf]
    %v184 = vld [vmem:[#allocation3 + $0x4] sm:$0xf]
    %v185 = vld [vmem:[#allocation3 + $0x8] sm:$0xf]
    %v186 = vld [vmem:[#allocation3 + $0xc] sm:$0xf]
    %v187 = vld [vmem:[#allocation3 + $0x10] sm:$0xf]
    %v188 = vld [vmem:[#allocation3 + $0x14] sm:$0xf]
    %v189 = vld [vmem:[#allocation3 + $0x18] sm:$0xf]
    %v190 = vld [vmem:[#allocation3 + $0x1c] sm:$0xf]
    %v191 = vld [vmem:[#allocation3 + $0x20] sm:$0xf]
    %v192 = vld [vmem:[#allocation3 + $0x24] sm:$0xf]
    %v193 = vld [vmem:[#allocation3 + $0x28] sm:$0xf]
    %v194 = vld [vmem:[#allocation3 + $0x2c] sm:$0xf]
    %v195 = vld [vmem:[#allocation3 + $0x30] sm:$0xf]
    %v196 = vld [vmem:[#allocation3 + $0x34] sm:$0xf]
    %v197 = vld [vmem:[#allocation3 + $0x38] sm:$0xf]
    %v198 = vld [vmem:[#allocation3 + $0x3c] sm:$0xf]
    %v199 = vld [vmem:[#allocation3 + $0x40] sm:$0xf]
    %v200 = vld [vmem:[#allocation3 + $0x44] sm:$0xf]
    %v201 = vld [vmem:[#allocation3 + $0x48] sm:$0xf]
    %v202 = vld [vmem:[#allocation3 + $0x4c] sm:$0xf]
    %v203 = vld [vmem:[#allocation3 + $0x50] sm:$0xf]
    %v204 = vld [vmem:[#allocation3 + $0x54] sm:$0xf]
    %v205 = vld [vmem:[#allocation3 + $0x58] sm:$0xf]
    %v206 = vld [vmem:[#allocation3 + $0x5c] sm:$0xf]
    %v207 = vld [vmem:[#allocation3 + $0x60] sm:$0xf]
    %v208 = vld [vmem:[#allocation3 + $0x64] sm:$0xf]
    %v209 = vld [vmem:[#allocation3 + $0x68] sm:$0xf]
    %v210 = vld [vmem:[#allocation3 + $0x6c] sm:$0xf]
    %v211 = vld [vmem:[#allocation3 + $0x70] sm:$0xf]
    %v212 = vld [vmem:[#allocation3 + $0x74] sm:$0xf]
    %v213 = vld [vmem:[#allocation3 + $0x78] sm:$0xf]
    %v214 = vld [vmem:[#allocation3 + $0x7c] sm:$0xf]
    %v215 = vld [vmem:[#allocation3 + $0x80] sm:$0xf]
    %v216 = vld [vmem:[#allocation3 + $0x84] sm:$0xf]
    %v217 = vld [vmem:[#allocation3 + $0x88] sm:$0xf]
    %v218 = vld [vmem:[#allocation3 + $0x8c] sm:$0xf]
    %v219 = vld [vmem:[#allocation3 + $0x90] sm:$0xf]
    %v220 = vld [vmem:[#allocation3 + $0x94] sm:$0xf]
    %v221 = vld [vmem:[#allocation3 + $0x98] sm:$0xf]
    %v222 = vld [vmem:[#allocation3 + $0x9c] sm:$0xf]
    %v223 = vld [vmem:[#allocation3 + $0xa0] sm:$0xf]
    %v224 = vld [vmem:[#allocation3 + $0xa4] sm:$0xf]
    %v225 = vld [vmem:[#allocation3 + $0xa8] sm:$0xf]
    %v226 = vld [vmem:[#allocation3 + $0xac] sm:$0xf]
    %v227 = vld [vmem:[#allocation3 + $0xb0] sm:$0xf]
    %v228 = vld [vmem:[#allocation3 + $0xb4] sm:$0xf]
    %v229 = vld [vmem:[#allocation3 + $0xb8] sm:$0xf]
    %v230 = vld [vmem:[#allocation3 + $0xbc] sm:$0xf]
    %v231 = vld [vmem:[#allocation3 + $0xc0] sm:$0xf]
    %v232 = vld [vmem:[#allocation3 + $0xc4] sm:$0xf]
    %v233 = vld [vmem:[#allocation3 + $0xc8] sm:$0xf]
    %v234 = vld [vmem:[#allocation3 + $0xcc] sm:$0xf]
    %v235 = vld [vmem:[#allocation3 + $0xd0] sm:$0xf]
    %v236 = vld [vmem:[#allocation3 + $0xd4] sm:$0xf]
    %v237 = vld [vmem:[#allocation3 + $0xd8] sm:$0xf]
    %v238 = vld [vmem:[#allocation3 + $0xdc] sm:$0xf]
    %v239 = vld [vmem:[#allocation3 + $0xe0] sm:$0xf]
    %v240 = vld [vmem:[#allocation3 + $0xe4] sm:$0xf]
    %v241 = vld [vmem:[#allocation3 + $0xe8] sm:$0xf]
    %v242 = vld [vmem:[#allocation3 + $0xec] sm:$0xf]
    %v243 = vld [vmem:[#allocation3 + $0xf0] sm:$0xf]
    %v244 = vld [vmem:[#allocation3 + $0xf4] sm:$0xf]
    %v245 = vld [vmem:[#allocation3 + $0xf8] sm:$0xf]
    %v246 = vld [vmem:[#allocation3 + $0xfc] sm:$0xf]
    %v247 = vld [vmem:[#allocation6] sm:$0xf]
    %v248 = vld [vmem:[#allocation6 + $0x4] sm:$0xf]
    %v249 = vld [vmem:[#allocation6 + $0x8] sm:$0xf]
    %v250 = vld [vmem:[#allocation6 + $0xc] sm:$0xf]
    %v251 = vld [vmem:[#allocation6 + $0x10] sm:$0xf]
    %v252 = vld [vmem:[#allocation6 + $0x14] sm:$0xf]
    %v253 = vld [vmem:[#allocation6 + $0x18] sm:$0xf]
    %v254 = vld [vmem:[#allocation6 + $0x1c] sm:$0xf]
    %v255 = vld [vmem:[#allocation6 + $0x20] sm:$0xf]
    %v256 = vld [vmem:[#allocation6 + $0x24] sm:$0xf]
    %v257 = vld [vmem:[#allocation6 + $0x28] sm:$0xf]
    %v258 = vld [vmem:[#allocation6 + $0x2c] sm:$0xf]
    %v259 = vld [vmem:[#allocation6 + $0x30] sm:$0xf]
    %v260 = vld [vmem:[#allocation6 + $0x34] sm:$0xf]
    %v261 = vld [vmem:[#allocation6 + $0x38] sm:$0xf]
    %v262 = vld [vmem:[#allocation6 + $0x3c] sm:$0xf]
    %v327 = vunpack.c.l.b16 %v183
    %v328 = vunpack.c.l.b16 %v184
    %v329 = vunpack.c.l.b16 %v185
    %v330 = vunpack.c.l.b16 %v186
    %v331 = vunpack.c.l.b16 %v187
    %v332 = vunpack.c.l.b16 %v188
    %v333 = vunpack.c.l.b16 %v189
    %v334 = vunpack.c.l.b16 %v190
    %v335 = vunpack.c.l.b16 %v191
    %v336 = vunpack.c.l.b16 %v192
    %v337 = vunpack.c.l.b16 %v193
    %v338 = vunpack.c.l.b16 %v194
    %v339 = vunpack.c.l.b16 %v195
    %v340 = vunpack.c.l.b16 %v196
    %v341 = vunpack.c.l.b16 %v197
    %v342 = vunpack.c.l.b16 %v198
    %v343 = vunpack.c.l.b16 %v199
    %v344 = vunpack.c.l.b16 %v200
    %v345 = vunpack.c.l.b16 %v201
    %v346 = vunpack.c.l.b16 %v202
    %v347 = vunpack.c.l.b16 %v203
    %v348 = vunpack.c.l.b16 %v204
    %v349 = vunpack.c.l.b16 %v205
    %v350 = vunpack.c.l.b16 %v206
    %v351 = vunpack.c.l.b16 %v207
    %v352 = vunpack.c.l.b16 %v208
    %v353 = vunpack.c.l.b16 %v209
    %v354 = vunpack.c.l.b16 %v210
    %v355 = vunpack.c.l.b16 %v211
    %v356 = vunpack.c.l.b16 %v212
    %v357 = vunpack.c.l.b16 %v213
    %v358 = vunpack.c.l.b16 %v214
    %v359 = vunpack.c.l.b16 %v215
    %v360 = vunpack.c.l.b16 %v216
    %v361 = vunpack.c.l.b16 %v217
    %v362 = vunpack.c.l.b16 %v218
    %v363 = vunpack.c.l.b16 %v219
    %v364 = vunpack.c.l.b16 %v220
    %v365 = vunpack.c.l.b16 %v221
    %v366 = vunpack.c.l.b16 %v222
    %v367 = vunpack.c.l.b16 %v223
    %v368 = vunpack.c.l.b16 %v224
    %v369 = vunpack.c.l.b16 %v225
    %v370 = vunpack.c.l.b16 %v226
    %v371 = vunpack.c.l.b16 %v227
    %v372 = vunpack.c.l.b16 %v228
    %v373 = vunpack.c.l.b16 %v229
    %v374 = vunpack.c.l.b16 %v230
    %v375 = vunpack.c.l.b16 %v231
    %v376 = vunpack.c.l.b16 %v232
    %v377 = vunpack.c.l.b16 %v233
    %v378 = vunpack.c.l.b16 %v234
    %v379 = vunpack.c.l.b16 %v235
    %v380 = vunpack.c.l.b16 %v236
    %v381 = vunpack.c.l.b16 %v237
    %v382 = vunpack.c.l.b16 %v238
    %v383 = vunpack.c.l.b16 %v239
    %v384 = vunpack.c.l.b16 %v240
    %v385 = vunpack.c.l.b16 %v241
    %v386 = vunpack.c.l.b16 %v242
    %v387 = vunpack.c.l.b16 %v243
    %v388 = vunpack.c.l.b16 %v244
    %v389 = vunpack.c.l.b16 %v245
    %v390 = vunpack.c.l.b16 %v246
    %v391 = vpack.c.b16 %v328, %v327
    %v392 = vpack.c.b16 %v330, %v329
    %v393 = vpack.c.b16 %v332, %v331
    %v394 = vpack.c.b16 %v334, %v333
    %v395 = vpack.c.b16 %v336, %v335
    %v396 = vpack.c.b16 %v338, %v337
    %v397 = vpack.c.b16 %v340, %v339
    %v398 = vpack.c.b16 %v342, %v341
    %v399 = vpack.c.b16 %v344, %v343
    %v400 = vpack.c.b16 %v346, %v345
    %v401 = vpack.c.b16 %v348, %v347
    %v402 = vpack.c.b16 %v350, %v349
    %v403 = vpack.c.b16 %v352, %v351
    %v404 = vpack.c.b16 %v354, %v353
    %v405 = vpack.c.b16 %v356, %v355
    %v406 = vpack.c.b16 %v358, %v357
    %v407 = vpack.c.b16 %v360, %v359
    %v408 = vpack.c.b16 %v362, %v361
    %v409 = vpack.c.b16 %v364, %v363
    %v410 = vpack.c.b16 %v366, %v365
    %v411 = vpack.c.b16 %v368, %v367
    %v412 = vpack.c.b16 %v370, %v369
    %v413 = vpack.c.b16 %v372, %v371
    %v414 = vpack.c.b16 %v374, %v373
    %v415 = vpack.c.b16 %v376, %v375
    %v416 = vpack.c.b16 %v378, %v377
    %v417 = vpack.c.b16 %v380, %v379
    %v418 = vpack.c.b16 %v382, %v381
    %v419 = vpack.c.b16 %v384, %v383
    %v420 = vpack.c.b16 %v386, %v385
    %v421 = vpack.c.b16 %v388, %v387
    %v422 = vpack.c.b16 %v390, %v389
    %v471 = vunpack.c.l.b16 %v247
    %v472 = vunpack.c.l.b16 %v248
    %v473 = vunpack.c.l.b16 %v249
    %v474 = vunpack.c.l.b16 %v250
    %v475 = vunpack.c.l.b16 %v251
    %v476 = vunpack.c.l.b16 %v252
    %v477 = vunpack.c.l.b16 %v253
    %v478 = vunpack.c.l.b16 %v254
    %v479 = vunpack.c.l.b16 %v255
    %v480 = vunpack.c.l.b16 %v256
    %v481 = vunpack.c.l.b16 %v257
    %v482 = vunpack.c.l.b16 %v258
    %v483 = vunpack.c.l.b16 %v259
    %v484 = vunpack.c.l.b16 %v260
    %v485 = vunpack.c.l.b16 %v261
    %v486 = vunpack.c.l.b16 %v262
    %v487 = vpack.c.b16 %v472, %v471
    %v488 = vpack.c.b16 %v474, %v473
    %v489 = vpack.c.b16 %v476, %v475
    %v490 = vpack.c.b16 %v478, %v477
    %v491 = vpack.c.b16 %v480, %v479
    %v492 = vpack.c.b16 %v482, %v481
    %v493 = vpack.c.b16 %v484, %v483
    %v494 = vpack.c.b16 %v486, %v485
    %503 = vmatprep.subr.bf16.mxu0 0
    %504 = vmatpush1.bf16.msra.mxu0 %v487
    %505 = vmatprep.subr.bf16.mxu0 0
    %506 = vmatpush1.bf16.msra.mxu0 %v488
    %507 = vmatprep.subr.bf16.mxu0 0
    %508 = vmatpush1.bf16.msra.mxu0 %v489
    %509 = vmatprep.subr.bf16.mxu0 0
    %510 = vmatpush1.bf16.msra.mxu0 %v490
    %511 = vmatprep.subr.bf16.mxu0 0
    %512 = vmatpush1.bf16.msra.mxu0 %v491
    %513 = vmatprep.subr.bf16.mxu0 0
    %514 = vmatpush1.bf16.msra.mxu0 %v492
    %515 = vmatprep.subr.bf16.mxu0 0
    %516 = vmatpush1.bf16.msra.mxu0 %v493
    %517 = vmatprep.subr.bf16.mxu0 0
    %518 = vmatpush1.bf16.msra.mxu0 %v494
    %519 = vmatprep.subr.bf16.mxu0 0
    %520 = vmatpush1.bf16.msra.mxu0 0
    %521 = vmatprep.subr.bf16.mxu0 0
    %522 = vmatpush1.bf16.msra.mxu0 0
    %523 = vmatprep.subr.bf16.mxu0 0
    %524 = vmatpush1.bf16.msra.mxu0 0
    %525 = vmatprep.subr.bf16.mxu0 0
    %526 = vmatpush1.bf16.msra.mxu0 0
    %527 = vmatprep.subr.bf16.mxu0 0
    %528 = vmatpush1.bf16.msra.mxu0 0
    %529 = vmatprep.subr.bf16.mxu0 0
    %530 = vmatpush1.bf16.msra.mxu0 0
    %531 = vmatprep.subr.bf16.mxu0 0
    %532 = vmatpush1.bf16.msra.mxu0 0
    %533 = vmatprep.subr.bf16.mxu0 0
    %534 = vmatpush1.bf16.msra.mxu0 0
    %535 = vmatprep.mubr.bf16.mxu0 0
    %536 = vmatmul.mubr.bf16.gmra.mrb[0].mxu0 %v391
    %v537 = vpop.f32.mrb[0].mxu0
    %v538 = vadd.f32 0.0, %v537
    %v539 = vpop.f32.mrb[0].mxu0
    %v540 = vpop.f32.mrb[0].mxu0
    %v541 = vadd.f32 0.0, %v540
    %v542 = vpop.f32.mrb[0].mxu0
    %543 = vmatprep.mubr.bf16.mxu0 0
    %544 = vmatmul.mubr.bf16.gmra.mrb[0].mxu0 %v392
    %v545 = vpop.f32.mrb[0].mxu0
    %v546 = vadd.f32 0.0, %v545
    %v547 = vpop.f32.mrb[0].mxu0
    %v548 = vpop.f32.mrb[0].mxu0
    %v549 = vadd.f32 0.0, %v548
    %v550 = vpop.f32.mrb[0].mxu0
    %551 = vmatprep.mubr.bf16.mxu0 0
    %552 = vmatmul.mubr.bf16.gmra.mrb[0].mxu0 %v393
    %v553 = vpop.f32.mrb[0].mxu0
    %v554 = vadd.f32 0.0, %v553
    %v555 = vpop.f32.mrb[0].mxu0
    %v556 = vpop.f32.mrb[0].mxu0
    %v557 = vadd.f32 0.0, %v556
    %v558 = vpop.f32.mrb[0].mxu0
    %559 = vmatprep.mubr.bf16.mxu0 0
    %560 = vmatmul.mubr.bf16.gmra.mrb[0].mxu0 %v394
    %v561 = vpop.f32.mrb[0].mxu0
    %v562 = vadd.f32 0.0, %v561
    %v563 = vpop.f32.mrb[0].mxu0
    %v564 = vpop.f32.mrb[0].mxu0
    %v565 = vadd.f32 0.0, %v564
    %v566 = vpop.f32.mrb[0].mxu0
    %567 = vmatprep.mubr.bf16.mxu0 0
    %568 = vmatmul.mubr.bf16.gmra.mrb[0].mxu0 %v395
    %v569 = vpop.f32.mrb[0].mxu0
    %v570 = vadd.f32 0.0, %v569
    %v571 = vpop.f32.mrb[0].mxu0
    %v572 = vpop.f32.mrb[0].mxu0
    %v573 = vadd.f32 0.0, %v572
    %v574 = vpop.f32.mrb[0].mxu0
    %575 = vmatprep.mubr.bf16.mxu0 0
    %576 = vmatmul.mubr.bf16.gmra.mrb[0].mxu0 %v396
    %v577 = vpop.f32.mrb[0].mxu0
    %v578 = vadd.f32 0.0, %v577
    %v579 = vpop.f32.mrb[0].mxu0
    %v580 = vpop.f32.mrb[0].mxu0
    %v581 = vadd.f32 0.0, %v580
    %v582 = vpop.f32.mrb[0].mxu0
    %583 = vmatprep.mubr.bf16.mxu0 0
    %584 = vmatmul.mubr.bf16.gmra.mrb[0].mxu0 %v397
    %v585 = vpop.f32.mrb[0].mxu0
    %v586 = vadd.f32 0.0, %v585
    %v587 = vpop.f32.mrb[0].mxu0
    %v588 = vpop.f32.mrb[0].mxu0
    %v589 = vadd.f32 0.0, %v588
    %v590 = vpop.f32.mrb[0].mxu0
    %591 = vmatprep.mubr.bf16.mxu0 0
    %592 = vmatmul.mubr.bf16.gmra.mrb[0].mxu0 %v398
    %v593 = vpop.f32.mrb[0].mxu0
    %v594 = vadd.f32 0.0, %v593
    %v595 = vpop.f32.mrb[0].mxu0
    %v596 = vpop.f32.mrb[0].mxu0
    %v597 = vadd.f32 0.0, %v596
    %v598 = vpop.f32.mrb[0].mxu0
    %599 = vmatprep.mubr.bf16.mxu0 0
    %600 = vmatmul.mubr.bf16.gmra.mrb[0].mxu0 %v399
    %v601 = vpop.f32.mrb[0].mxu0
    %v602 = vadd.f32 0.0, %v601
    %v603 = vpop.f32.mrb[0].mxu0
    %v604 = vpop.f32.mrb[0].mxu0
    %v605 = vadd.f32 0.0, %v604
    %v606 = vpop.f32.mrb[0].mxu0
    %607 = vmatprep.mubr.bf16.mxu0 0
    %608 = vmatmul.mubr.bf16.gmra.mrb[0].mxu0 %v400
    %v609 = vpop.f32.mrb[0].mxu0
    %v610 = vadd.f32 0.0, %v609
    %v611 = vpop.f32.mrb[0].mxu0
    %v612 = vpop.f32.mrb[0].mxu0
    %v613 = vadd.f32 0.0, %v612
    %v614 = vpop.f32.mrb[0].mxu0
    %615 = vmatprep.mubr.bf16.mxu0 0
    %616 = vmatmul.mubr.bf16.gmra.mrb[0].mxu0 %v401
    %v617 = vpop.f32.mrb[0].mxu0
    %v618 = vadd.f32 0.0, %v617
    %v619 = vpop.f32.mrb[0].mxu0
    %v620 = vpop.f32.mrb[0].mxu0
    %v621 = vadd.f32 0.0, %v620
    %v622 = vpop.f32.mrb[0].mxu0
    %623 = vmatprep.mubr.bf16.mxu0 0
    %624 = vmatmul.mubr.bf16.gmra.mrb[0].mxu0 %v402
    %v625 = vpop.f32.mrb[0].mxu0
    %v626 = vadd.f32 0.0, %v625
    %v627 = vpop.f32.mrb[0].mxu0
    %v628 = vpop.f32.mrb[0].mxu0
    %v629 = vadd.f32 0.0, %v628
    %v630 = vpop.f32.mrb[0].mxu0
    %631 = vmatprep.mubr.bf16.mxu0 0
    %632 = vmatmul.mubr.bf16.gmra.mrb[0].mxu0 %v403
    %v633 = vpop.f32.mrb[0].mxu0
    %v634 = vadd.f32 0.0, %v633
    %v635 = vpop.f32.mrb[0].mxu0
    %v636 = vpop.f32.mrb[0].mxu0
    %v637 = vadd.f32 0.0, %v636
    %v638 = vpop.f32.mrb[0].mxu0
    %639 = vmatprep.mubr.bf16.mxu0 0
    %640 = vmatmul.mubr.bf16.gmra.mrb[0].mxu0 %v404
    %v641 = vpop.f32.mrb[0].mxu0
    %v642 = vadd.f32 0.0, %v641
    %v643 = vpop.f32.mrb[0].mxu0
    %v644 = vpop.f32.mrb[0].mxu0
    %v645 = vadd.f32 0.0, %v644
    %v646 = vpop.f32.mrb[0].mxu0
    %647 = vmatprep.mubr.bf16.mxu0 0
    %648 = vmatmul.mubr.bf16.gmra.mrb[0].mxu0 %v405
    %v649 = vpop.f32.mrb[0].mxu0
    %v650 = vadd.f32 0.0, %v649
    %v651 = vpop.f32.mrb[0].mxu0
    %v652 = vpop.f32.mrb[0].mxu0
    %v653 = vadd.f32 0.0, %v652
    %v654 = vpop.f32.mrb[0].mxu0
    %655 = vmatprep.mubr.bf16.mxu0 0
    %656 = vmatmul.mubr.bf16.gmra.mrb[0].mxu0 %v406
    %v657 = vpop.f32.mrb[0].mxu0
    %v658 = vadd.f32 0.0, %v657
    %v659 = vpop.f32.mrb[0].mxu0
    %v660 = vpop.f32.mrb[0].mxu0
    %v661 = vadd.f32 0.0, %v660
    %v662 = vpop.f32.mrb[0].mxu0
    %663 = vmatprep.mubr.bf16.mxu0 0
    %664 = vmatmul.mubr.bf16.gmra.mrb[0].mxu0 %v407
    %v665 = vpop.f32.mrb[0].mxu0
    %v666 = vadd.f32 0.0, %v665
    %v667 = vpop.f32.mrb[0].mxu0
    %v668 = vpop.f32.mrb[0].mxu0
    %v669 = vadd.f32 0.0, %v668
    %v670 = vpop.f32.mrb[0].mxu0
    %671 = vmatprep.mubr.bf16.mxu0 0
    %672 = vmatmul.mubr.bf16.gmra.mrb[0].mxu0 %v408
    %v673 = vpop.f32.mrb[0].mxu0
    %v674 = vadd.f32 0.0, %v673
    %v675 = vpop.f32.mrb[0].mxu0
    %v676 = vpop.f32.mrb[0].mxu0
    %v677 = vadd.f32 0.0, %v676
    %v678 = vpop.f32.mrb[0].mxu0
    %679 = vmatprep.mubr.bf16.mxu0 0
    %680 = vmatmul.mubr.bf16.gmra.mrb[0].mxu0 %v409
    %v681 = vpop.f32.mrb[0].mxu0
    %v682 = vadd.f32 0.0, %v681
    %v683 = vpop.f32.mrb[0].mxu0
    %v684 = vpop.f32.mrb[0].mxu0
    %v685 = vadd.f32 0.0, %v684
    %v686 = vpop.f32.mrb[0].mxu0
    %687 = vmatprep.mubr.bf16.mxu0 0
    %688 = vmatmul.mubr.bf16.gmra.mrb[0].mxu0 %v410
    %v689 = vpop.f32.mrb[0].mxu0
    %v690 = vadd.f32 0.0, %v689
    %v691 = vpop.f32.mrb[0].mxu0
    %v692 = vpop.f32.mrb[0].mxu0
    %v693 = vadd.f32 0.0, %v692
    %v694 = vpop.f32.mrb[0].mxu0
    %695 = vmatprep.mubr.bf16.mxu0 0
    %696 = vmatmul.mubr.bf16.gmra.mrb[0].mxu0 %v411
    %v697 = vpop.f32.mrb[0].mxu0
    %v698 = vadd.f32 0.0, %v697
    %v699 = vpop.f32.mrb[0].mxu0
    %v700 = vpop.f32.mrb[0].mxu0
    %v701 = vadd.f32 0.0, %v700
    %v702 = vpop.f32.mrb[0].mxu0
    %703 = vmatprep.mubr.bf16.mxu0 0
    %704 = vmatmul.mubr.bf16.gmra.mrb[0].mxu0 %v412
    %v705 = vpop.f32.mrb[0].mxu0
    %v706 = vadd.f32 0.0, %v705
    %v707 = vpop.f32.mrb[0].mxu0
    %v708 = vpop.f32.mrb[0].mxu0
    %v709 = vadd.f32 0.0, %v708
    %v710 = vpop.f32.mrb[0].mxu0
    %711 = vmatprep.mubr.bf16.mxu0 0
    %712 = vmatmul.mubr.bf16.gmra.mrb[0].mxu0 %v413
    %v713 = vpop.f32.mrb[0].mxu0
    %v714 = vadd.f32 0.0, %v713
    %v715 = vpop.f32.mrb[0].mxu0
    %v716 = vpop.f32.mrb[0].mxu0
    %v717 = vadd.f32 0.0, %v716
    %v718 = vpop.f32.mrb[0].mxu0
    %719 = vmatprep.mubr.bf16.mxu0 0
    %720 = vmatmul.mubr.bf16.gmra.mrb[0].mxu0 %v414
    %v721 = vpop.f32.mrb[0].mxu0
    %v722 = vadd.f32 0.0, %v721
    %v723 = vpop.f32.mrb[0].mxu0
    %v724 = vpop.f32.mrb[0].mxu0
    %v725 = vadd.f32 0.0, %v724
    %v726 = vpop.f32.mrb[0].mxu0
    %727 = vmatprep.mubr.bf16.mxu0 0
    %728 = vmatmul.mubr.bf16.gmra.mrb[0].mxu0 %v415
    %v729 = vpop.f32.mrb[0].mxu0
    %v730 = vadd.f32 0.0, %v729
    %v731 = vpop.f32.mrb[0].mxu0
    %v732 = vpop.f32.mrb[0].mxu0
    %v733 = vadd.f32 0.0, %v732
    %v734 = vpop.f32.mrb[0].mxu0
    %735 = vmatprep.mubr.bf16.mxu0 0
    %736 = vmatmul.mubr.bf16.gmra.mrb[0].mxu0 %v416
    %v737 = vpop.f32.mrb[0].mxu0
    %v738 = vadd.f32 0.0, %v737
    %v739 = vpop.f32.mrb[0].mxu0
    %v740 = vpop.f32.mrb[0].mxu0
    %v741 = vadd.f32 0.0, %v740
    %v742 = vpop.f32.mrb[0].mxu0
    %743 = vmatprep.mubr.bf16.mxu0 0
    %744 = vmatmul.mubr.bf16.gmra.mrb[0].mxu0 %v417
    %v745 = vpop.f32.mrb[0].mxu0
    %v746 = vadd.f32 0.0, %v745
    %v747 = vpop.f32.mrb[0].mxu0
    %v748 = vpop.f32.mrb[0].mxu0
    %v749 = vadd.f32 0.0, %v748
    %v750 = vpop.f32.mrb[0].mxu0
    %751 = vmatprep.mubr.bf16.mxu0 0
    %752 = vmatmul.mubr.bf16.gmra.mrb[0].mxu0 %v418
    %v753 = vpop.f32.mrb[0].mxu0
    %v754 = vadd.f32 0.0, %v753
    %v755 = vpop.f32.mrb[0].mxu0
    %v756 = vpop.f32.mrb[0].mxu0
    %v757 = vadd.f32 0.0, %v756
    %v758 = vpop.f32.mrb[0].mxu0
    %759 = vmatprep.mubr.bf16.mxu0 0
    %760 = vmatmul.mubr.bf16.gmra.mrb[0].mxu0 %v419
    %v761 = vpop.f32.mrb[0].mxu0
    %v762 = vadd.f32 0.0, %v761
    %v763 = vpop.f32.mrb[0].mxu0
    %v764 = vpop.f32.mrb[0].mxu0
    %v765 = vadd.f32 0.0, %v764
    %v766 = vpop.f32.mrb[0].mxu0
    %767 = vmatprep.mubr.bf16.mxu0 0
    %768 = vmatmul.mubr.bf16.gmra.mrb[0].mxu0 %v420
    %v769 = vpop.f32.mrb[0].mxu0
    %v770 = vadd.f32 0.0, %v769
    %v771 = vpop.f32.mrb[0].mxu0
    %v772 = vpop.f32.mrb[0].mxu0
    %v773 = vadd.f32 0.0, %v772
    %v774 = vpop.f32.mrb[0].mxu0
    %775 = vmatprep.mubr.bf16.mxu0 0
    %776 = vmatmul.mubr.bf16.gmra.mrb[0].mxu0 %v421
    %v777 = vpop.f32.mrb[0].mxu0
    %v778 = vadd.f32 0.0, %v777
    %v779 = vpop.f32.mrb[0].mxu0
    %v780 = vpop.f32.mrb[0].mxu0
    %v781 = vadd.f32 0.0, %v780
    %v782 = vpop.f32.mrb[0].mxu0
    %783 = vmatprep.mubr.bf16.mxu0 0
    %784 = vmatmul.mubr.bf16.gmra.mrb[0].mxu0 %v422
    %v785 = vpop.f32.mrb[0].mxu0
    %v786 = vadd.f32 0.0, %v785
    %v787 = vpop.f32.mrb[0].mxu0
    %v788 = vpop.f32.mrb[0].mxu0
    %v789 = vadd.f32 0.0, %v788
    %v790 = vpop.f32.mrb[0].mxu0
    %791 = vdwg.mxu0
    %v792 = vadd.f32 %v119, %v538
    %v793 = vadd.f32 %v120, %v541
    %v794 = vadd.f32 %v121, %v546
    %v795 = vadd.f32 %v122, %v549
    %v796 = vadd.f32 %v123, %v554
    %v797 = vadd.f32 %v124, %v557
    %v798 = vadd.f32 %v125, %v562
    %v799 = vadd.f32 %v126, %v565
    %v800 = vadd.f32 %v127, %v570
    %v801 = vadd.f32 %v128, %v573
    %v802 = vadd.f32 %v129, %v578
    %v803 = vadd.f32 %v130, %v581
    %v804 = vadd.f32 %v131, %v586
    %v805 = vadd.f32 %v132, %v589
    %v806 = vadd.f32 %v133, %v594
    %v807 = vadd.f32 %v134, %v597
    %v808 = vadd.f32 %v135, %v602
    %v809 = vadd.f32 %v136, %v605
    %v810 = vadd.f32 %v137, %v610
    %v811 = vadd.f32 %v138, %v613
    %v812 = vadd.f32 %v139, %v618
    %v813 = vadd.f32 %v140, %v621
    %v814 = vadd.f32 %v141, %v626
    %v815 = vadd.f32 %v142, %v629
    %v816 = vadd.f32 %v143, %v634
    %v817 = vadd.f32 %v144, %v637
    %v818 = vadd.f32 %v145, %v642
    %v819 = vadd.f32 %v146, %v645
    %v820 = vadd.f32 %v147, %v650
    %v821 = vadd.f32 %v148, %v653
    %v822 = vadd.f32 %v149, %v658
    %v823 = vadd.f32 %v150, %v661
    %v824 = vadd.f32 %v151, %v666
    %v825 = vadd.f32 %v152, %v669
    %v826 = vadd.f32 %v153, %v674
    %v827 = vadd.f32 %v154, %v677
    %v828 = vadd.f32 %v155, %v682
    %v829 = vadd.f32 %v156, %v685
    %v830 = vadd.f32 %v157, %v690
    %v831 = vadd.f32 %v158, %v693
    %v832 = vadd.f32 %v159, %v698
    %v833 = vadd.f32 %v160, %v701
    %v834 = vadd.f32 %v161, %v706
    %v835 = vadd.f32 %v162, %v709
    %v836 = vadd.f32 %v163, %v714
    %v837 = vadd.f32 %v164, %v717
    %v838 = vadd.f32 %v165, %v722
    %v839 = vadd.f32 %v166, %v725
    %v840 = vadd.f32 %v167, %v730
    %v841 = vadd.f32 %v168, %v733
    %v842 = vadd.f32 %v169, %v738
    %v843 = vadd.f32 %v170, %v741
    %v844 = vadd.f32 %v171, %v746
    %v845 = vadd.f32 %v172, %v749
    %v846 = vadd.f32 %v173, %v754
    %v847 = vadd.f32 %v174, %v757
    %v848 = vadd.f32 %v175, %v762
    %v849 = vadd.f32 %v176, %v765
    %v850 = vadd.f32 %v177, %v770
    %v851 = vadd.f32 %v178, %v773
    %v852 = vadd.f32 %v179, %v778
    %v853 = vadd.f32 %v180, %v781
    %v854 = vadd.f32 %v181, %v786
    %v855 = vadd.f32 %v182, %v789
    %856 = vst [vmem:[#allocation2] sm:$0xff] %v792
    %857 = vst [vmem:[#allocation2 + $0x8] sm:$0xff] %v793
    %858 = vst [vmem:[#allocation2 + $0x10] sm:$0xff] %v794
    %859 = vst [vmem:[#allocation2 + $0x18] sm:$0xff] %v795
    %860 = vst [vmem:[#allocation2 + $0x20] sm:$0xff] %v796
    %861 = vst [vmem:[#allocation2 + $0x28] sm:$0xff] %v797
    %862 = vst [vmem:[#allocation2 + $0x30] sm:$0xff] %v798
    %863 = vst [vmem:[#allocation2 + $0x38] sm:$0xff] %v799
    %864 = vst [vmem:[#allocation2 + $0x40] sm:$0xff] %v800
    %865 = vst [vmem:[#allocation2 + $0x48] sm:$0xff] %v801
    %866 = vst [vmem:[#allocation2 + $0x50] sm:$0xff] %v802
    %867 = vst [vmem:[#allocation2 + $0x58] sm:$0xff] %v803
    %868 = vst [vmem:[#allocation2 + $0x60] sm:$0xff] %v804
    %869 = vst [vmem:[#allocation2 + $0x68] sm:$0xff] %v805
    %870 = vst [vmem:[#allocation2 + $0x70] sm:$0xff] %v806
    %871 = vst [vmem:[#allocation2 + $0x78] sm:$0xff] %v807
    %872 = vst [vmem:[#allocation2 + $0x80] sm:$0xff] %v808
    %873 = vst [vmem:[#allocation2 + $0x88] sm:$0xff] %v809
    %874 = vst [vmem:[#allocation2 + $0x90] sm:$0xff] %v810
    %875 = vst [vmem:[#allocation2 + $0x98] sm:$0xff] %v811
    %876 = vst [vmem:[#allocation2 + $0xa0] sm:$0xff] %v812
    %877 = vst [vmem:[#allocation2 + $0xa8] sm:$0xff] %v813
    %878 = vst [vmem:[#allocation2 + $0xb0] sm:$0xff] %v814
    %879 = vst [vmem:[#allocation2 + $0xb8] sm:$0xff] %v815
    %880 = vst [vmem:[#allocation2 + $0xc0] sm:$0xff] %v816
    %881 = vst [vmem:[#allocation2 + $0xc8] sm:$0xff] %v817
    %882 = vst [vmem:[#allocation2 + $0xd0] sm:$0xff] %v818
    %883 = vst [vmem:[#allocation2 + $0xd8] sm:$0xff] %v819
    %884 = vst [vmem:[#allocation2 + $0xe0] sm:$0xff] %v820
    %885 = vst [vmem:[#allocation2 + $0xe8] sm:$0xff] %v821
    %886 = vst [vmem:[#allocation2 + $0xf0] sm:$0xff] %v822
    %887 = vst [vmem:[#allocation2 + $0xf8] sm:$0xff] %v823
    %888 = vst [vmem:[#allocation2 + $0x100] sm:$0xff] %v824
    %889 = vst [vmem:[#allocation2 + $0x108] sm:$0xff] %v825
    %890 = vst [vmem:[#allocation2 + $0x110] sm:$0xff] %v826
    %891 = vst [vmem:[#allocation2 + $0x118] sm:$0xff] %v827
    %892 = vst [vmem:[#allocation2 + $0x120] sm:$0xff] %v828
    %893 = vst [vmem:[#allocation2 + $0x128] sm:$0xff] %v829
    %894 = vst [vmem:[#allocation2 + $0x130] sm:$0xff] %v830
    %895 = vst [vmem:[#allocation2 + $0x138] sm:$0xff] %v831
    %896 = vst [vmem:[#allocation2 + $0x140] sm:$0xff] %v832
    %897 = vst [vmem:[#allocation2 + $0x148] sm:$0xff] %v833
    %898 = vst [vmem:[#allocation2 + $0x150] sm:$0xff] %v834
    %899 = vst [vmem:[#allocation2 + $0x158] sm:$0xff] %v835
    %900 = vst [vmem:[#allocation2 + $0x160] sm:$0xff] %v836
    %901 = vst [vmem:[#allocation2 + $0x168] sm:$0xff] %v837
    %902 = vst [vmem:[#allocation2 + $0x170] sm:$0xff] %v838
    %903 = vst [vmem:[#allocation2 + $0x178] sm:$0xff] %v839
    %904 = vst [vmem:[#allocation2 + $0x180] sm:$0xff] %v840
    %905 = vst [vmem:[#allocation2 + $0x188] sm:$0xff] %v841
    %906 = vst [vmem:[#allocation2 + $0x190] sm:$0xff] %v842
    %907 = vst [vmem:[#allocation2 + $0x198] sm:$0xff] %v843
    %908 = vst [vmem:[#allocation2 + $0x1a0] sm:$0xff] %v844
    %909 = vst [vmem:[#allocation2 + $0x1a8] sm:$0xff] %v845
    %910 = vst [vmem:[#allocation2 + $0x1b0] sm:$0xff] %v846
    %911 = vst [vmem:[#allocation2 + $0x1b8] sm:$0xff] %v847
    %912 = vst [vmem:[#allocation2 + $0x1c0] sm:$0xff] %v848
    %913 = vst [vmem:[#allocation2 + $0x1c8] sm:$0xff] %v849
    %914 = vst [vmem:[#allocation2 + $0x1d0] sm:$0xff] %v850
    %915 = vst [vmem:[#allocation2 + $0x1d8] sm:$0xff] %v851
    %916 = vst [vmem:[#allocation2 + $0x1e0] sm:$0xff] %v852
    %917 = vst [vmem:[#allocation2 + $0x1e8] sm:$0xff] %v853
    %918 = vst [vmem:[#allocation2 + $0x1f0] sm:$0xff] %v854
    %919 = vst [vmem:[#allocation2 + $0x1f8] sm:$0xff] %v855
    // Predicated region
    $region26: #{tpu_custom_call.1} parent=1 // pred_check
      %p920 = pneg %p44
    $region27: #{tpu_custom_call.1} parent=1 // pred_check_branch
      %922 = sbr.rel (%p920) target = $region29
    $region28: #{tpu_custom_call.1} parent=1 // pred_region
      %v923 = vld [vmem:[#allocation2] sm:$0xff]
      %v924 = vld [vmem:[#allocation2 + $0x8] sm:$0xff]
      %v925 = vld [vmem:[#allocation2 + $0x10] sm:$0xff]
      %v926 = vld [vmem:[#allocation2 + $0x18] sm:$0xff]
      %v927 = vld [vmem:[#allocation2 + $0x20] sm:$0xff]
      %v928 = vld [vmem:[#allocation2 + $0x28] sm:$0xff]
      %v929 = vld [vmem:[#allocation2 + $0x30] sm:$0xff]
      %v930 = vld [vmem:[#allocation2 + $0x38] sm:$0xff]
      %v931 = vld [vmem:[#allocation2 + $0x40] sm:$0xff]
      %v932 = vld [vmem:[#allocation2 + $0x48] sm:$0xff]
      %v933 = vld [vmem:[#allocation2 + $0x50] sm:$0xff]
      %v934 = vld [vmem:[#allocation2 + $0x58] sm:$0xff]
      %v935 = vld [vmem:[#allocation2 + $0x60] sm:$0xff]
      %v936 = vld [vmem:[#allocation2 + $0x68] sm:$0xff]
      %v937 = vld [vmem:[#allocation2 + $0x70] sm:$0xff]
      %v938 = vld [vmem:[#allocation2 + $0x78] sm:$0xff]
      %v939 = vld [vmem:[#allocation2 + $0x80] sm:$0xff]
      %v940 = vld [vmem:[#allocation2 + $0x88] sm:$0xff]
      %v941 = vld [vmem:[#allocation2 + $0x90] sm:$0xff]
      %v942 = vld [vmem:[#allocation2 + $0x98] sm:$0xff]
      %v943 = vld [vmem:[#allocation2 + $0xa0] sm:$0xff]
      %v944 = vld [vmem:[#allocation2 + $0xa8] sm:$0xff]
      %v945 = vld [vmem:[#allocation2 + $0xb0] sm:$0xff]
      %v946 = vld [vmem:[#allocation2 + $0xb8] sm:$0xff]
      %v947 = vld [vmem:[#allocation2 + $0xc0] sm:$0xff]
      %v948 = vld [vmem:[#allocation2 + $0xc8] sm:$0xff]
      %v949 = vld [vmem:[#allocation2 + $0xd0] sm:$0xff]
      %v950 = vld [vmem:[#allocation2 + $0xd8] sm:$0xff]
      %v951 = vld [vmem:[#allocation2 + $0xe0] sm:$0xff]
      %v952 = vld [vmem:[#allocation2 + $0xe8] sm:$0xff]
      %v953 = vld [vmem:[#allocation2 + $0xf0] sm:$0xff]
      %v954 = vld [vmem:[#allocation2 + $0xf8] sm:$0xff]
      %v955 = vld [vmem:[#allocation2 + $0x100] sm:$0xff]
      %v956 = vld [vmem:[#allocation2 + $0x108] sm:$0xff]
      %v957 = vld [vmem:[#allocation2 + $0x110] sm:$0xff]
      %v958 = vld [vmem:[#allocation2 + $0x118] sm:$0xff]
      %v959 = vld [vmem:[#allocation2 + $0x120] sm:$0xff]
      %v960 = vld [vmem:[#allocation2 + $0x128] sm:$0xff]
      %v961 = vld [vmem:[#allocation2 + $0x130] sm:$0xff]
      %v962 = vld [vmem:[#allocation2 + $0x138] sm:$0xff]
      %v963 = vld [vmem:[#allocation2 + $0x140] sm:$0xff]
      %v964 = vld [vmem:[#allocation2 + $0x148] sm:$0xff]
      %v965 = vld [vmem:[#allocation2 + $0x150] sm:$0xff]
      %v966 = vld [vmem:[#allocation2 + $0x158] sm:$0xff]
      %v967 = vld [vmem:[#allocation2 + $0x160] sm:$0xff]
      %v968 = vld [vmem:[#allocation2 + $0x168] sm:$0xff]
      %v969 = vld [vmem:[#allocation2 + $0x170] sm:$0xff]
      %v970 = vld [vmem:[#allocation2 + $0x178] sm:$0xff]
      %v971 = vld [vmem:[#allocation2 + $0x180] sm:$0xff]
      %v972 = vld [vmem:[#allocation2 + $0x188] sm:$0xff]
      %v973 = vld [vmem:[#allocation2 + $0x190] sm:$0xff]
      %v974 = vld [vmem:[#allocation2 + $0x198] sm:$0xff]
      %v975 = vld [vmem:[#allocation2 + $0x1a0] sm:$0xff]
      %v976 = vld [vmem:[#allocation2 + $0x1a8] sm:$0xff]
      %v977 = vld [vmem:[#allocation2 + $0x1b0] sm:$0xff]
      %v978 = vld [vmem:[#allocation2 + $0x1b8] sm:$0xff]
      %v979 = vld [vmem:[#allocation2 + $0x1c0] sm:$0xff]
      %v980 = vld [vmem:[#allocation2 + $0x1c8] sm:$0xff]
      %v981 = vld [vmem:[#allocation2 + $0x1d0] sm:$0xff]
      %v982 = vld [vmem:[#allocation2 + $0x1d8] sm:$0xff]
      %v983 = vld [vmem:[#allocation2 + $0x1e0] sm:$0xff]
      %v984 = vld [vmem:[#allocation2 + $0x1e8] sm:$0xff]
      %v985 = vld [vmem:[#allocation2 + $0x1f0] sm:$0xff]
      %v986 = vld [vmem:[#allocation2 + $0x1f8] sm:$0xff]
      %vm987 = vcmp.ge.f32.partialorder %v923, 0.0
      %vm988 = vcmp.ge.f32.partialorder %v924, 0.0
      %vm989 = vcmp.ge.f32.partialorder %v925, 0.0
      %vm990 = vcmp.ge.f32.partialorder %v926, 0.0
      %vm991 = vcmp.ge.f32.partialorder %v927, 0.0
      %vm992 = vcmp.ge.f32.partialorder %v928, 0.0
      %vm993 = vcmp.ge.f32.partialorder %v929, 0.0
      %vm994 = vcmp.ge.f32.partialorder %v930, 0.0
      %vm995 = vcmp.ge.f32.partialorder %v931, 0.0
      %vm996 = vcmp.ge.f32.partialorder %v932, 0.0
      %vm997 = vcmp.ge.f32.partialorder %v933, 0.0
      %vm998 = vcmp.ge.f32.partialorder %v934, 0.0
      %vm999 = vcmp.ge.f32.partialorder %v935, 0.0
      %vm1000 = vcmp.ge.f32.partialorder %v936, 0.0
      %vm1001 = vcmp.ge.f32.partialorder %v937, 0.0
      %vm1002 = vcmp.ge.f32.partialorder %v938, 0.0
      %vm1003 = vcmp.ge.f32.partialorder %v939, 0.0
      %vm1004 = vcmp.ge.f32.partialorder %v940, 0.0
      %vm1005 = vcmp.ge.f32.partialorder %v941, 0.0
      %vm1006 = vcmp.ge.f32.partialorder %v942, 0.0
      %vm1007 = vcmp.ge.f32.partialorder %v943, 0.0
      %vm1008 = vcmp.ge.f32.partialorder %v944, 0.0
      %vm1009 = vcmp.ge.f32.partialorder %v945, 0.0
      %vm1010 = vcmp.ge.f32.partialorder %v946, 0.0
      %vm1011 = vcmp.ge.f32.partialorder %v947, 0.0
      %vm1012 = vcmp.ge.f32.partialorder %v948, 0.0
      %vm1013 = vcmp.ge.f32.partialorder %v949, 0.0
      %vm1014 = vcmp.ge.f32.partialorder %v950, 0.0
      %vm1015 = vcmp.ge.f32.partialorder %v951, 0.0
      %vm1016 = vcmp.ge.f32.partialorder %v952, 0.0
      %vm1017 = vcmp.ge.f32.partialorder %v953, 0.0
      %vm1018 = vcmp.ge.f32.partialorder %v954, 0.0
      %vm1019 = vcmp.ge.f32.partialorder %v955, 0.0
      %vm1020 = vcmp.ge.f32.partialorder %v956, 0.0
      %vm1021 = vcmp.ge.f32.partialorder %v957, 0.0
      %vm1022 = vcmp.ge.f32.partialorder %v958, 0.0
      %vm1023 = vcmp.ge.f32.partialorder %v959, 0.0
      %vm1024 = vcmp.ge.f32.partialorder %v960, 0.0
      %vm1025 = vcmp.ge.f32.partialorder %v961, 0.0
      %vm1026 = vcmp.ge.f32.partialorder %v962, 0.0
      %vm1027 = vcmp.ge.f32.partialorder %v963, 0.0
      %vm1028 = vcmp.ge.f32.partialorder %v964, 0.0
      %vm1029 = vcmp.ge.f32.partialorder %v965, 0.0
      %vm1030 = vcmp.ge.f32.partialorder %v966, 0.0
      %vm1031 = vcmp.ge.f32.partialorder %v967, 0.0
      %vm1032 = vcmp.ge.f32.partialorder %v968, 0.0
      %vm1033 = vcmp.ge.f32.partialorder %v969, 0.0
      %vm1034 = vcmp.ge.f32.partialorder %v970, 0.0
      %vm1035 = vcmp.ge.f32.partialorder %v971, 0.0
      %vm1036 = vcmp.ge.f32.partialorder %v972, 0.0
      %vm1037 = vcmp.ge.f32.partialorder %v973, 0.0
      %vm1038 = vcmp.ge.f32.partialorder %v974, 0.0
      %vm1039 = vcmp.ge.f32.partialorder %v975, 0.0
      %vm1040 = vcmp.ge.f32.partialorder %v976, 0.0
      %vm1041 = vcmp.ge.f32.partialorder %v977, 0.0
      %vm1042 = vcmp.ge.f32.partialorder %v978, 0.0
      %vm1043 = vcmp.ge.f32.partialorder %v979, 0.0
      %vm1044 = vcmp.ge.f32.partialorder %v980, 0.0
      %vm1045 = vcmp.ge.f32.partialorder %v981, 0.0
      %vm1046 = vcmp.ge.f32.partialorder %v982, 0.0
      %vm1047 = vcmp.ge.f32.partialorder %v983, 0.0
      %vm1048 = vcmp.ge.f32.partialorder %v984, 0.0
      %vm1049 = vcmp.ge.f32.partialorder %v985, 0.0
      %vm1050 = vcmp.ge.f32.partialorder %v986, 0.0
      %v1051 = vmul.f32 %v923, 0.1
      %v1052 = vmul.f32 %v924, 0.1
      %v1053 = vmul.f32 %v925, 0.1
      %v1054 = vmul.f32 %v926, 0.1
      %v1055 = vmul.f32 %v927, 0.1
      %v1056 = vmul.f32 %v928, 0.1
      %v1057 = vmul.f32 %v929, 0.1
      %v1058 = vmul.f32 %v930, 0.1
      %v1059 = vmul.f32 %v931, 0.1
      %v1060 = vmul.f32 %v932, 0.1
      %v1061 = vmul.f32 %v933, 0.1
      %v1062 = vmul.f32 %v934, 0.1
      %v1063 = vmul.f32 %v935, 0.1
      %v1064 = vmul.f32 %v936, 0.1
      %v1065 = vmul.f32 %v937, 0.1
      %v1066 = vmul.f32 %v938, 0.1
      %v1067 = vmul.f32 %v939, 0.1
      %v1068 = vmul.f32 %v940, 0.1
      %v1069 = vmul.f32 %v941, 0.1
      %v1070 = vmul.f32 %v942, 0.1
      %v1071 = vmul.f32 %v943, 0.1
      %v1072 = vmul.f32 %v944, 0.1
      %v1073 = vmul.f32 %v945, 0.1
      %v1074 = vmul.f32 %v946, 0.1
      %v1075 = vmul.f32 %v947, 0.1
      %v1076 = vmul.f32 %v948, 0.1
      %v1077 = vmul.f32 %v949, 0.1
      %v1078 = vmul.f32 %v950, 0.1
      %v1079 = vmul.f32 %v951, 0.1
      %v1080 = vmul.f32 %v952, 0.1
      %v1081 = vmul.f32 %v953, 0.1
      %v1082 = vmul.f32 %v954, 0.1
      %v1083 = vmul.f32 %v955, 0.1
      %v1084 = vmul.f32 %v956, 0.1
      %v1085 = vmul.f32 %v957, 0.1
      %v1086 = vmul.f32 %v958, 0.1
      %v1087 = vmul.f32 %v959, 0.1
      %v1088 = vmul.f32 %v960, 0.1
      %v1089 = vmul.f32 %v961, 0.1
      %v1090 = vmul.f32 %v962, 0.1
      %v1091 = vmul.f32 %v963, 0.1
      %v1092 = vmul.f32 %v964, 0.1
      %v1093 = vmul.f32 %v965, 0.1
      %v1094 = vmul.f32 %v966, 0.1
      %v1095 = vmul.f32 %v967, 0.1
      %v1096 = vmul.f32 %v968, 0.1
      %v1097 = vmul.f32 %v969, 0.1
      %v1098 = vmul.f32 %v970, 0.1
      %v1099 = vmul.f32 %v971, 0.1
      %v1100 = vmul.f32 %v972, 0.1
      %v1101 = vmul.f32 %v973, 0.1
      %v1102 = vmul.f32 %v974, 0.1
      %v1103 = vmul.f32 %v975, 0.1
      %v1104 = vmul.f32 %v976, 0.1
      %v1105 = vmul.f32 %v977, 0.1
      %v1106 = vmul.f32 %v978, 0.1
      %v1107 = vmul.f32 %v979, 0.1
      %v1108 = vmul.f32 %v980, 0.1
      %v1109 = vmul.f32 %v981, 0.1
      %v1110 = vmul.f32 %v982, 0.1
      %v1111 = vmul.f32 %v983, 0.1
      %v1112 = vmul.f32 %v984, 0.1
      %v1113 = vmul.f32 %v985, 0.1
      %v1114 = vmul.f32 %v986, 0.1
      %v1115 = vsel %vm987, %v923, %v1051
      %v1116 = vsel %vm988, %v924, %v1052
      %v1117 = vsel %vm989, %v925, %v1053
      %v1118 = vsel %vm990, %v926, %v1054
      %v1119 = vsel %vm991, %v927, %v1055
      %v1120 = vsel %vm992, %v928, %v1056
      %v1121 = vsel %vm993, %v929, %v1057
      %v1122 = vsel %vm994, %v930, %v1058
      %v1123 = vsel %vm995, %v931, %v1059
      %v1124 = vsel %vm996, %v932, %v1060
      %v1125 = vsel %vm997, %v933, %v1061
      %v1126 = vsel %vm998, %v934, %v1062
      %v1127 = vsel %vm999, %v935, %v1063
      %v1128 = vsel %vm1000, %v936, %v1064
      %v1129 = vsel %vm1001, %v937, %v1065
      %v1130 = vsel %vm1002, %v938, %v1066
      %v1131 = vsel %vm1003, %v939, %v1067
      %v1132 = vsel %vm1004, %v940, %v1068
      %v1133 = vsel %vm1005, %v941, %v1069
      %v1134 = vsel %vm1006, %v942, %v1070
      %v1135 = vsel %vm1007, %v943, %v1071
      %v1136 = vsel %vm1008, %v944, %v1072
      %v1137 = vsel %vm1009, %v945, %v1073
      %v1138 = vsel %vm1010, %v946, %v1074
      %v1139 = vsel %vm1011, %v947, %v1075
      %v1140 = vsel %vm1012, %v948, %v1076
      %v1141 = vsel %vm1013, %v949, %v1077
      %v1142 = vsel %vm1014, %v950, %v1078
      %v1143 = vsel %vm1015, %v951, %v1079
      %v1144 = vsel %vm1016, %v952, %v1080
      %v1145 = vsel %vm1017, %v953, %v1081
      %v1146 = vsel %vm1018, %v954, %v1082
      %v1147 = vsel %vm1019, %v955, %v1083
      %v1148 = vsel %vm1020, %v956, %v1084
      %v1149 = vsel %vm1021, %v957, %v1085
      %v1150 = vsel %vm1022, %v958, %v1086
      %v1151 = vsel %vm1023, %v959, %v1087
      %v1152 = vsel %vm1024, %v960, %v1088
      %v1153 = vsel %vm1025, %v961, %v1089
      %v1154 = vsel %vm1026, %v962, %v1090
      %v1155 = vsel %vm1027, %v963, %v1091
      %v1156 = vsel %vm1028, %v964, %v1092
      %v1157 = vsel %vm1029, %v965, %v1093
      %v1158 = vsel %vm1030, %v966, %v1094
      %v1159 = vsel %vm1031, %v967, %v1095
      %v1160 = vsel %vm1032, %v968, %v1096
      %v1161 = vsel %vm1033, %v969, %v1097
      %v1162 = vsel %vm1034, %v970, %v1098
      %v1163 = vsel %vm1035, %v971, %v1099
      %v1164 = vsel %vm1036, %v972, %v1100
      %v1165 = vsel %vm1037, %v973, %v1101
      %v1166 = vsel %vm1038, %v974, %v1102
      %v1167 = vsel %vm1039, %v975, %v1103
      %v1168 = vsel %vm1040, %v976, %v1104
      %v1169 = vsel %vm1041, %v977, %v1105
      %v1170 = vsel %vm1042, %v978, %v1106
      %v1171 = vsel %vm1043, %v979, %v1107
      %v1172 = vsel %vm1044, %v980, %v1108
      %v1173 = vsel %vm1045, %v981, %v1109
      %v1174 = vsel %vm1046, %v982, %v1110
      %v1175 = vsel %vm1047, %v983, %v1111
      %v1176 = vsel %vm1048, %v984, %v1112
      %v1177 = vsel %vm1049, %v985, %v1113
      %v1178 = vsel %vm1050, %v986, %v1114
      %v1179 = vpack.c.bf16 %v1116, %v1115
      %v1180 = vpack.c.bf16 %v1118, %v1117
      %v1181 = vpack.c.bf16 %v1120, %v1119
      %v1182 = vpack.c.bf16 %v1122, %v1121
      %v1183 = vpack.c.bf16 %v1124, %v1123
      %v1184 = vpack.c.bf16 %v1126, %v1125
      %v1185 = vpack.c.bf16 %v1128, %v1127
      %v1186 = vpack.c.bf16 %v1130, %v1129
      %v1187 = vpack.c.bf16 %v1132, %v1131
      %v1188 = vpack.c.bf16 %v1134, %v1133
      %v1189 = vpack.c.bf16 %v1136, %v1135
      %v1190 = vpack.c.bf16 %v1138, %v1137
      %v1191 = vpack.c.bf16 %v1140, %v1139
      %v1192 = vpack.c.bf16 %v1142, %v1141
      %v1193 = vpack.c.bf16 %v1144, %v1143
      %v1194 = vpack.c.bf16 %v1146, %v1145
      %v1195 = vpack.c.bf16 %v1148, %v1147
      %v1196 = vpack.c.bf16 %v1150, %v1149
      %v1197 = vpack.c.bf16 %v1152, %v1151
      %v1198 = vpack.c.bf16 %v1154, %v1153
      %v1199 = vpack.c.bf16 %v1156, %v1155
      %v1200 = vpack.c.bf16 %v1158, %v1157
      %v1201 = vpack.c.bf16 %v1160, %v1159
      %v1202 = vpack.c.bf16 %v1162, %v1161
      %v1203 = vpack.c.bf16 %v1164, %v1163
      %v1204 = vpack.c.bf16 %v1166, %v1165
      %v1205 = vpack.c.bf16 %v1168, %v1167
      %v1206 = vpack.c.bf16 %v1170, %v1169
      %v1207 = vpack.c.bf16 %v1172, %v1171
      %v1208 = vpack.c.bf16 %v1174, %v1173
      %v1209 = vpack.c.bf16 %v1176, %v1175
      %v1210 = vpack.c.bf16 %v1178, %v1177
      %v1243 = vunpack.c.l.b16 %v1179
      %v1244 = vunpack.c.h.b16 %v1179
      %v1245 = vunpack.c.l.b16 %v1180
      %v1246 = vunpack.c.h.b16 %v1180
      %v1247 = vunpack.c.l.b16 %v1181
      %v1248 = vunpack.c.h.b16 %v1181
      %v1249 = vunpack.c.l.b16 %v1182
      %v1250 = vunpack.c.h.b16 %v1182
      %v1251 = vunpack.c.l.b16 %v1183
      %v1252 = vunpack.c.h.b16 %v1183
      %v1253 = vunpack.c.l.b16 %v1184
      %v1254 = vunpack.c.h.b16 %v1184
      %v1255 = vunpack.c.l.b16 %v1185
      %v1256 = vunpack.c.h.b16 %v1185
      %v1257 = vunpack.c.l.b16 %v1186
      %v1258 = vunpack.c.h.b16 %v1186
      %v1259 = vunpack.c.l.b16 %v1187
      %v1260 = vunpack.c.h.b16 %v1187
      %v1261 = vunpack.c.l.b16 %v1188
      %v1262 = vunpack.c.h.b16 %v1188
      %v1263 = vunpack.c.l.b16 %v1189
      %v1264 = vunpack.c.h.b16 %v1189
      %v1265 = vunpack.c.l.b16 %v1190
      %v1266 = vunpack.c.h.b16 %v1190
      %v1267 = vunpack.c.l.b16 %v1191
      %v1268 = vunpack.c.h.b16 %v1191
      %v1269 = vunpack.c.l.b16 %v1192
      %v1270 = vunpack.c.h.b16 %v1192
      %v1271 = vunpack.c.l.b16 %v1193
      %v1272 = vunpack.c.h.b16 %v1193
      %v1273 = vunpack.c.l.b16 %v1194
      %v1274 = vunpack.c.h.b16 %v1194
      %v1275 = vunpack.c.l.b16 %v1195
      %v1276 = vunpack.c.h.b16 %v1195
      %v1277 = vunpack.c.l.b16 %v1196
      %v1278 = vunpack.c.h.b16 %v1196
      %v1279 = vunpack.c.l.b16 %v1197
      %v1280 = vunpack.c.h.b16 %v1197
      %v1281 = vunpack.c.l.b16 %v1198
      %v1282 = vunpack.c.h.b16 %v1198
      %v1283 = vunpack.c.l.b16 %v1199
      %v1284 = vunpack.c.h.b16 %v1199
      %v1285 = vunpack.c.l.b16 %v1200
      %v1286 = vunpack.c.h.b16 %v1200
      %v1287 = vunpack.c.l.b16 %v1201
      %v1288 = vunpack.c.h.b16 %v1201
      %v1289 = vunpack.c.l.b16 %v1202
      %v1290 = vunpack.c.h.b16 %v1202
      %v1291 = vunpack.c.l.b16 %v1203
      %v1292 = vunpack.c.h.b16 %v1203
      %v1293 = vunpack.c.l.b16 %v1204
      %v1294 = vunpack.c.h.b16 %v1204
      %v1295 = vunpack.c.l.b16 %v1205
      %v1296 = vunpack.c.h.b16 %v1205
      %v1297 = vunpack.c.l.b16 %v1206
      %v1298 = vunpack.c.h.b16 %v1206
      %v1299 = vunpack.c.l.b16 %v1207
      %v1300 = vunpack.c.h.b16 %v1207
      %v1301 = vunpack.c.l.b16 %v1208
      %v1302 = vunpack.c.h.b16 %v1208
      %v1303 = vunpack.c.l.b16 %v1209
      %v1304 = vunpack.c.h.b16 %v1209
      %v1305 = vunpack.c.l.b16 %v1210
      %v1306 = vunpack.c.h.b16 %v1210
      %v1307 = vpack.c.b16 %v1243, %v1243
      %v1308 = vpack.c.b16 %v1244, %v1244
      %v1309 = vpack.c.b16 %v1245, %v1245
      %v1310 = vpack.c.b16 %v1246, %v1246
      %v1311 = vpack.c.b16 %v1247, %v1247
      %v1312 = vpack.c.b16 %v1248, %v1248
      %v1313 = vpack.c.b16 %v1249, %v1249
      %v1314 = vpack.c.b16 %v1250, %v1250
      %v1315 = vpack.c.b16 %v1251, %v1251
      %v1316 = vpack.c.b16 %v1252, %v1252
      %v1317 = vpack.c.b16 %v1253, %v1253
      %v1318 = vpack.c.b16 %v1254, %v1254
      %v1319 = vpack.c.b16 %v1255, %v1255
      %v1320 = vpack.c.b16 %v1256, %v1256
      %v1321 = vpack.c.b16 %v1257, %v1257
      %v1322 = vpack.c.b16 %v1258, %v1258
      %v1323 = vpack.c.b16 %v1259, %v1259
      %v1324 = vpack.c.b16 %v1260, %v1260
      %v1325 = vpack.c.b16 %v1261, %v1261
      %v1326 = vpack.c.b16 %v1262, %v1262
      %v1327 = vpack.c.b16 %v1263, %v1263
      %v1328 = vpack.c.b16 %v1264, %v1264
      %v1329 = vpack.c.b16 %v1265, %v1265
      %v1330 = vpack.c.b16 %v1266, %v1266
      %v1331 = vpack.c.b16 %v1267, %v1267
      %v1332 = vpack.c.b16 %v1268, %v1268
      %v1333 = vpack.c.b16 %v1269, %v1269
      %v1334 = vpack.c.b16 %v1270, %v1270
      %v1335 = vpack.c.b16 %v1271, %v1271
      %v1336 = vpack.c.b16 %v1272, %v1272
      %v1337 = vpack.c.b16 %v1273, %v1273
      %v1338 = vpack.c.b16 %v1274, %v1274
      %v1339 = vpack.c.b16 %v1275, %v1275
      %v1340 = vpack.c.b16 %v1276, %v1276
      %v1341 = vpack.c.b16 %v1277, %v1277
      %v1342 = vpack.c.b16 %v1278, %v1278
      %v1343 = vpack.c.b16 %v1279, %v1279
      %v1344 = vpack.c.b16 %v1280, %v1280
      %v1345 = vpack.c.b16 %v1281, %v1281
      %v1346 = vpack.c.b16 %v1282, %v1282
      %v1347 = vpack.c.b16 %v1283, %v1283
      %v1348 = vpack.c.b16 %v1284, %v1284
      %v1349 = vpack.c.b16 %v1285, %v1285
      %v1350 = vpack.c.b16 %v1286, %v1286
      %v1351 = vpack.c.b16 %v1287, %v1287
      %v1352 = vpack.c.b16 %v1288, %v1288
      %v1353 = vpack.c.b16 %v1289, %v1289
      %v1354 = vpack.c.b16 %v1290, %v1290
      %v1355 = vpack.c.b16 %v1291, %v1291
      %v1356 = vpack.c.b16 %v1292, %v1292
      %v1357 = vpack.c.b16 %v1293, %v1293
      %v1358 = vpack.c.b16 %v1294, %v1294
      %v1359 = vpack.c.b16 %v1295, %v1295
      %v1360 = vpack.c.b16 %v1296, %v1296
      %v1361 = vpack.c.b16 %v1297, %v1297
      %v1362 = vpack.c.b16 %v1298, %v1298
      %v1363 = vpack.c.b16 %v1299, %v1299
      %v1364 = vpack.c.b16 %v1300, %v1300
      %v1365 = vpack.c.b16 %v1301, %v1301
      %v1366 = vpack.c.b16 %v1302, %v1302
      %v1367 = vpack.c.b16 %v1303, %v1303
      %v1368 = vpack.c.b16 %v1304, %v1304
      %v1369 = vpack.c.b16 %v1305, %v1305
      %v1370 = vpack.c.b16 %v1306, %v1306
      %1435 = vst [vmem:[#allocation8] sm:$0xf] %v1307
      %1436 = vst [vmem:[#allocation8 + $0x4] sm:$0xf] %v1308
      %1437 = vst [vmem:[#allocation8 + $0x8] sm:$0xf] %v1309
      %1438 = vst [vmem:[#allocation8 + $0xc] sm:$0xf] %v1310
      %1439 = vst [vmem:[#allocation8 + $0x10] sm:$0xf] %v1311
      %1440 = vst [vmem:[#allocation8 + $0x14] sm:$0xf] %v1312
      %1441 = vst [vmem:[#allocation8 + $0x18] sm:$0xf] %v1313
      %1442 = vst [vmem:[#allocation8 + $0x1c] sm:$0xf] %v1314
      %1443 = vst [vmem:[#allocation8 + $0x20] sm:$0xf] %v1315
      %1444 = vst [vmem:[#allocation8 + $0x24] sm:$0xf] %v1316
      %1445 = vst [vmem:[#allocation8 + $0x28] sm:$0xf] %v1317
      %1446 = vst [vmem:[#allocation8 + $0x2c] sm:$0xf] %v1318
      %1447 = vst [vmem:[#allocation8 + $0x30] sm:$0xf] %v1319
      %1448 = vst [vmem:[#allocation8 + $0x34] sm:$0xf] %v1320
      %1449 = vst [vmem:[#allocation8 + $0x38] sm:$0xf] %v1321
      %1450 = vst [vmem:[#allocation8 + $0x3c] sm:$0xf] %v1322
      %1451 = vst [vmem:[#allocation8 + $0x40] sm:$0xf] %v1323
      %1452 = vst [vmem:[#allocation8 + $0x44] sm:$0xf] %v1324
      %1453 = vst [vmem:[#allocation8 + $0x48] sm:$0xf] %v1325
      %1454 = vst [vmem:[#allocation8 + $0x4c] sm:$0xf] %v1326
      %1455 = vst [vmem:[#allocation8 + $0x50] sm:$0xf] %v1327
      %1456 = vst [vmem:[#allocation8 + $0x54] sm:$0xf] %v1328
      %1457 = vst [vmem:[#allocation8 + $0x58] sm:$0xf] %v1329
      %1458 = vst [vmem:[#allocation8 + $0x5c] sm:$0xf] %v1330
      %1459 = vst [vmem:[#allocation8 + $0x60] sm:$0xf] %v1331
      %1460 = vst [vmem:[#allocation8 + $0x64] sm:$0xf] %v1332
      %1461 = vst [vmem:[#allocation8 + $0x68] sm:$0xf] %v1333
      %1462 = vst [vmem:[#allocation8 + $0x6c] sm:$0xf] %v1334
      %1463 = vst [vmem:[#allocation8 + $0x70] sm:$0xf] %v1335
      %1464 = vst [vmem:[#allocation8 + $0x74] sm:$0xf] %v1336
      %1465 = vst [vmem:[#allocation8 + $0x78] sm:$0xf] %v1337
      %1466 = vst [vmem:[#allocation8 + $0x7c] sm:$0xf] %v1338
      %1467 = vst [vmem:[#allocation8 + $0x80] sm:$0xf] %v1339
      %1468 = vst [vmem:[#allocation8 + $0x84] sm:$0xf] %v1340
      %1469 = vst [vmem:[#allocation8 + $0x88] sm:$0xf] %v1341
      %1470 = vst [vmem:[#allocation8 + $0x8c] sm:$0xf] %v1342
      %1471 = vst [vmem:[#allocation8 + $0x90] sm:$0xf] %v1343
      %1472 = vst [vmem:[#allocation8 + $0x94] sm:$0xf] %v1344
      %1473 = vst [vmem:[#allocation8 + $0x98] sm:$0xf] %v1345
      %1474 = vst [vmem:[#allocation8 + $0x9c] sm:$0xf] %v1346
      %1475 = vst [vmem:[#allocation8 + $0xa0] sm:$0xf] %v1347
      %1476 = vst [vmem:[#allocation8 + $0xa4] sm:$0xf] %v1348
      %1477 = vst [vmem:[#allocation8 + $0xa8] sm:$0xf] %v1349
      %1478 = vst [vmem:[#allocation8 + $0xac] sm:$0xf] %v1350
      %1479 = vst [vmem:[#allocation8 + $0xb0] sm:$0xf] %v1351
      %1480 = vst [vmem:[#allocation8 + $0xb4] sm:$0xf] %v1352
      %1481 = vst [vmem:[#allocation8 + $0xb8] sm:$0xf] %v1353
      %1482 = vst [vmem:[#allocation8 + $0xbc] sm:$0xf] %v1354
      %1483 = vst [vmem:[#allocation8 + $0xc0] sm:$0xf] %v1355
      %1484 = vst [vmem:[#allocation8 + $0xc4] sm:$0xf] %v1356
      %1485 = vst [vmem:[#allocation8 + $0xc8] sm:$0xf] %v1357
      %1486 = vst [vmem:[#allocation8 + $0xcc] sm:$0xf] %v1358
      %1487 = vst [vmem:[#allocation8 + $0xd0] sm:$0xf] %v1359
      %1488 = vst [vmem:[#allocation8 + $0xd4] sm:$0xf] %v1360
      %1489 = vst [vmem:[#allocation8 + $0xd8] sm:$0xf] %v1361
      %1490 = vst [vmem:[#allocation8 + $0xdc] sm:$0xf] %v1362
      %1491 = vst [vmem:[#allocation8 + $0xe0] sm:$0xf] %v1363
      %1492 = vst [vmem:[#allocation8 + $0xe4] sm:$0xf] %v1364
      %1493 = vst [vmem:[#allocation8 + $0xe8] sm:$0xf] %v1365
      %1494 = vst [vmem:[#allocation8 + $0xec] sm:$0xf] %v1366
      %1495 = vst [vmem:[#allocation8 + $0xf0] sm:$0xf] %v1367
      %1496 = vst [vmem:[#allocation8 + $0xf4] sm:$0xf] %v1368
      %1497 = vst [vmem:[#allocation8 + $0xf8] sm:$0xf] %v1369
      %1498 = vst [vmem:[#allocation8 + $0xfc] sm:$0xf] %v1370
    $region29: #{tpu_custom_call.1} parent=1 // pred_fallthru
      _
    // Predicated region
    $region30: #{tpu_custom_call.1} parent=1 // pred_check
      _
    $region31: #{tpu_custom_call.1} parent=1 // pred_check_branch
      %1500 = sbr.rel (0) target = $region33
    $region32: #{tpu_custom_call.1} parent=1 // pred_region
      %s1502 = ssub.s32 4096, 4096
      %1503 = vsyncadd [#allocation5], %s1502
      %s1504 = sshll.u32 [#allocation8], 4
      %s1505 = int_to_ptr.vmem [resolvable:$true] %s1504
      %1510 = dma.vmem_to_hbm [thread:$0]  %s1505, 4096, %s3, [#allocation5], 64, 64, 4
    $region33: #{tpu_custom_call.1} parent=1 // pred_fallthru
      _
    // Predicated region
    $region34: #{tpu_custom_call.1} parent=1 // pred_check
      _
    $region35: #{tpu_custom_call.1} parent=1 // pred_check_branch
      %1512 = sbr.rel (0) target = $region37
    $region36: #{tpu_custom_call.1} parent=1 // pred_region
      %1513 = dma.done [#allocation5], 4096
    $region37: #{tpu_custom_call.1} parent=1 // pred_fallthru
      _
    %1514 = vsyncpa [#allocation4], 1
    %1515 = vsyncpa [#allocation7], 1
    %1516 = vsyncpa [#allocation5], 1

</llo_original>
